<compile_context>
chip_gen: v6e
topology: v6e:2x2x1
jax: 0.10.0
libtpu: 0.0.40
codegen_flags: <defaults>
</compile_context>

<pallas_src>
import functools

import jax
import jax.numpy as jnp
from jax import lax
from jax.experimental import pallas as pl
from jax.experimental.pallas import tpu as pltpu

_EPS = 1e-12  # torch.nn.functional.normalize default eps


def _round_up(x: int, m: int) -> int:
    return ((x + m - 1) // m) * m


def _l2_normalize_rows(x):
    # x / max(||x||_2, eps)  ==  x * rsqrt(max(sum(x^2), eps^2))
    sumsq = jnp.sum(x * x, axis=-1, keepdims=True)
    return x * lax.rsqrt(jnp.maximum(sumsq, _EPS * _EPS))


def _tpu_vmem_capacity_bytes() -> int:
    try:
        v = getattr(pltpu.get_tpu_info(), "vmem_capacity_bytes", None)
        if v:
            return int(v)
    except Exception:
        pass
    return 64 * 1024 * 1024  # conservative default (v7x per-TC VMEM)


def _num_tensorcores() -> int:
    try:
        info = pltpu.get_tpu_info()
        for name in ("num_cores", "core_count", "num_tensorcores", "tensorcore_count"):
            v = getattr(info, name, None)
            if isinstance(v, int) and v > 0:
                return v
    except Exception:
        pass
    return 1


def _pick_tile(B: int, tb_req: int, n_cores: int):
    b8 = _round_up(B, 8)
    tb = _round_up(max(8, min(int(tb_req), b8)), 8)
    # Force >= 2 grid steps only on multi-TensorCore parts (v7x megacore) and
    # only when the batch is big enough that splitting isn't pure overhead.
    if n_cores >= 2 and b8 >= 256 and pl.cdiv(b8, tb) < 2:
        tb = _round_up(pl.cdiv(b8, 2), 8)
    n_tiles = pl.cdiv(B, tb)
    return tb, n_tiles, n_tiles * tb


# ---------------------------------------------------------------------------
# Kernel 1: fused-gather path (small tables, resident in VMEM)
# ---------------------------------------------------------------------------
def _transe_fused_kernel(hi_ref, ti_ref, ri_ref, ent_ref, rel_ref, o_ref):
    """h/t/r gathered in-kernel from VMEM-resident, pre-normalized tables.

    The gather is a one-hot selection matmul on the otherwise-idle MXU; with
    HIGHEST precision the 0/1 selectors make it an exact row copy, so no
    intermediate (B, D) h/t/r tensors ever touch HBM.
    """
    tb = hi_ref.shape[0]

    def gather(idx_col, tab_ref):
        n = tab_ref.shape[0]
        onehot = (idx_col == lax.broadcasted_iota(jnp.int32, (tb, n), 1)
                  ).astype(jnp.float32)
        return jnp.dot(onehot, tab_ref[...].astype(jnp.float32),
                       preferred_element_type=jnp.float32,
                       precision=lax.Precision.HIGHEST)

    h = gather(hi_ref[...], ent_ref)
    t = gather(ti_ref[...], ent_ref)
    r = gather(ri_ref[...], rel_ref)
    # mode == 'normal', p_norm == 1
    o_ref[...] = jnp.sum(jnp.abs(h + r - t), axis=-1, keepdims=True)


# ---------------------------------------------------------------------------
# Kernel 2: streaming path (large tables; XLA gathers rows, rel pre-normalized)
# ---------------------------------------------------------------------------
def _transe_stream_kernel(h_ref, t_ref, r_ref, o_ref, *, normalize_r):
    h = _l2_normalize_rows(h_ref[...].astype(jnp.float32))
    t = _l2_normalize_rows(t_ref[...].astype(jnp.float32))
    r = r_ref[...].astype(jnp.float32)
    if normalize_r:
        r = _l2_normalize_rows(r)
    o_ref[...] = jnp.sum(jnp.abs(h + r - t), axis=-1, keepdims=True)


def transe_forward(ent_emb, rel_emb, batch_h, batch_t, batch_r, *,
                   tb=2048, fused_tb=512, fuse_max_rows=4096, margin=None):
    """TransE scores (mode='normal', norm_flag=True, p_norm=1), shape (B,)."""
    B = int(batch_h.shape[0])
    if B == 0:                                   # empty-batch guard
        score = jnp.zeros((0,), jnp.float32)
        return (margin - score) if margin is not None else score

    ent_num, D = int(ent_emb.shape[0]), int(ent_emb.shape[1])
    rel_num = int(rel_emb.shape[0])

    vmem_cap = _tpu_vmem_capacity_bytes()
    vmem_budget = int(0.75 * vmem_cap)           # ~48 MiB v7x, ~96 MiB v5e/v6e
    n_cores = _num_tensorcores()

    ent_bytes = ent_num * D * 4
    rel_bytes = rel_num * D * 4

    batch_h = batch_h.astype(jnp.int32)
    batch_t = batch_t.astype(jnp.int32)
    batch_r = batch_r.astype(jnp.int32)

    # Fused gather only when the one-hot matmul stays cheap AND both tables
    # (double-buffered) comfortably fit the generation-specific VMEM budget.
    fuse = (ent_num + rel_num <= int(fuse_max_rows)
            and 2 * (ent_bytes + rel_bytes) <= vmem_budget // 2)

    if fuse:
        # ---------- fused-gather path: tables resident in VMEM -------------
        max_rows = max(ent_num, rel_num, 1)
        tb_req = min(int(fused_tb), max(128, (2 << 20) // (4 * max_rows)))
        tb_eff, n_tiles, b_pad = _pick_tile(B, tb_req, n_cores)
        if b_pad != B:
            pad = b_pad - B                      # padded rows use index 0; sliced off
            batch_h = jnp.pad(batch_h, (0, pad))
            batch_t = jnp.pad(batch_t, (0, pad))
            batch_r = jnp.pad(batch_r, (0, pad))
        hi = batch_h.reshape(b_pad, 1)
        ti = batch_t.reshape(b_pad, 1)
        ri = batch_r.reshape(b_pad, 1)

        # Normalize each (small) table once instead of 3x per batch row.
        ent_n = _l2_normalize_rows(ent_emb.astype(jnp.float32))
        rel_n = _l2_normalize_rows(rel_emb.astype(jnp.float32))

        idx_spec = pl.BlockSpec((tb_eff, 1), lambda i: (i, 0))
        ent_spec = pl.BlockSpec((ent_num, D), lambda i: (0, 0))   # resident
        rel_spec = pl.BlockSpec((rel_num, D), lambda i: (0, 0))   # resident

        vmem_need = (2 * (ent_bytes + rel_bytes)
                     + 8 * tb_eff * 4
                     + 4 * tb_eff * max_rows * 4
                     + 6 * tb_eff * D * 4
                     + (4 << 20))
        vmem_limit = min(max(vmem_need, 16 << 20), vmem_budget)

        out = pl.pallas_call(
            _transe_fused_kernel,
            out_shape=jax.ShapeDtypeStruct((b_pad, 1), jnp.float32),
            grid_spec=pltpu.PrefetchScalarGridSpec(
                num_scalar_prefetch=0,
                grid=(n_tiles,),
                in_specs=[idx_spec, idx_spec, idx_spec, ent_spec, rel_spec],
                out_specs=pl.BlockSpec((tb_eff, 1), lambda i: (i, 0)),
            ),
            compiler_params=pltpu.CompilerParams(
                dimension_semantics=("parallel",),
                vmem_limit_bytes=vmem_limit,
            ),
        )(hi, ti, ri, ent_n, rel_n)
    else:
        # ---------- streaming path: large tables ---------------------------
        # TODO(synk): for mid-size tables a scalar-prefetch + pl.ANY per-row
        # DMA gather could remove the remaining gather write+read; at D=200
        # each row is only an 800 B DMA so it currently loses to XLA's gather.
        itemsize = jnp.dtype(ent_emb.dtype).itemsize
        tb_eff, n_tiles, b_pad = _pick_tile(B, tb, n_cores)
        while (tb_eff > 8 and
               2 * (3 * tb_eff * D * itemsize + tb_eff * 4) > int(0.6 * vmem_budget)):
            tb_eff = _round_up(tb_eff // 2, 8)
        n_tiles = pl.cdiv(B, tb_eff)
        b_pad = n_tiles * tb_eff
        if b_pad != B:
            pad = b_pad - B
            batch_h = jnp.pad(batch_h, (0, pad))
            batch_t = jnp.pad(batch_t, (0, pad))
            batch_r = jnp.pad(batch_r, (0, pad))

        # Pre-normalize the (typically tiny) relation table once; only fall
        # back to in-kernel normalization if the table is unusually large.
        norm_r_in_kernel = rel_num > max(4 * B, 65536)
        rel_src = (rel_emb if norm_r_in_kernel
                   else _l2_normalize_rows(rel_emb.astype(jnp.float32)))

        h = jnp.take(ent_emb, batch_h, axis=0)   # (b_pad, D)
        t = jnp.take(ent_emb, batch_t, axis=0)
        r = jnp.take(rel_src, batch_r, axis=0)

        row_spec = pl.BlockSpec((tb_eff, D), lambda i: (i, 0))
        bytes_per_step = 3 * tb_eff * D * itemsize + tb_eff * 4
        vmem_limit = min(max(2 * bytes_per_step + (8 << 20), 16 << 20), vmem_budget)

        out = pl.pallas_call(
            functools.partial(_transe_stream_kernel, normalize_r=norm_r_in_kernel),
            out_shape=jax.ShapeDtypeStruct((b_pad, 1), jnp.float32),
            grid_spec=pltpu.PrefetchScalarGridSpec(
                num_scalar_prefetch=0,
                grid=(n_tiles,),
                in_specs=[row_spec, row_spec, row_spec],
                out_specs=pl.BlockSpec((tb_eff, 1), lambda i: (i, 0)),
            ),
            compiler_params=pltpu.CompilerParams(
                dimension_semantics=("parallel",),
                vmem_limit_bytes=vmem_limit,
            ),
        )(h, t, r)

    score = out.reshape(-1)[:B]                  # .flatten() in the PyTorch code
    if margin is not None:                       # margin_flag=True branch
        score = margin - score
    return score


def _reference(ent_emb, rel_emb, batch_h, batch_t, batch_r):
    def l2n(x):
        n = jnp.sqrt(jnp.sum(x * x, axis=-1, keepdims=True))
        return x / jnp.maximum(n, _EPS)

    h = l2n(jnp.take(ent_emb, batch_h, axis=0))
    t = l2n(jnp.take(ent_emb, batch_t, axis=0))
    r = l2n(jnp.take(rel_emb, batch_r, axis=0))
    return jnp.sum(jnp.abs(h + r - t), axis=-1)


if __name__ == "__main__":
    key = jax.random.PRNGKey(0)
    k_ent, k_rel, k_h, k_t, k_r = jax.random.split(key, 5)

    ent_num, rel_num, dim = 64, 16, 200          # module default dim=200
    B = 16

    # Deterministic xavier_uniform-style init (margin=None / epsilon=None branch).
    ent_bound = (6.0 / (ent_num + dim)) ** 0.5
    rel_bound = (6.0 / (rel_num + dim)) ** 0.5
    ent_emb = jax.random.uniform(k_ent, (ent_num, dim), jnp.float32,
                                 -ent_bound, ent_bound)
    rel_emb = jax.random.uniform(k_rel, (rel_num, dim), jnp.float32,
                                 -rel_bound, rel_bound)

    batch_h = jax.random.randint(k_h, (B,), 0, ent_num, dtype=jnp.int32)
    batch_t = jax.random.randint(k_t, (B,), 0, ent_num, dtype=jnp.int32)
    batch_r = jax.random.randint(k_r, (B,), 0, rel_num, dtype=jnp.int32)

    # Path 1: fused-gather kernel (tables resident in VMEM — default for small tables)
    score = transe_forward(ent_emb, rel_emb, batch_h, batch_t, batch_r)
    jax.block_until_ready(score)
    ref = _reference(ent_emb, rel_emb, batch_h, batch_t, batch_r)
    assert score.shape == (B,)
    assert jnp.allclose(score, ref, atol=1e-4, rtol=1e-5), (
        float(jnp.max(jnp.abs(score - ref))))

    # Path 2: streaming large-table fallback, with a ragged batch (B=13) to
    # exercise the tail-padding path.
    Bo = 13
    score2 = transe_forward(ent_emb, rel_emb,
                            batch_h[:Bo], batch_t[:Bo], batch_r[:Bo],
                            fuse_max_rows=0)
    jax.block_until_ready(score2)
    ref2 = _reference(ent_emb, rel_emb, batch_h[:Bo], batch_t[:Bo], batch_r[:Bo])
    assert score2.shape == (Bo,)
    assert jnp.allclose(score2, ref2, atol=1e-4, rtol=1e-5), (
        float(jnp.max(jnp.abs(score2 - ref2))))

    print("KERNEL_OK")
</pallas_src>

<mosaic_0001>
module attributes {stable_mosaic.version = 11 : i64} {
  func.func @_transe_fused_kernel(%arg0: i32, %arg1: memref<16x1xi32, #tpu.memory_space<vmem>>, %arg2: memref<16x1xi32, #tpu.memory_space<vmem>>, %arg3: memref<16x1xi32, #tpu.memory_space<vmem>>, %arg4: memref<64x200xf32, #tpu.memory_space<vmem>>, %arg5: memref<16x200xf32, #tpu.memory_space<vmem>>, %arg6: memref<16x1xf32, #tpu.memory_space<vmem>>) attributes {dimension_semantics = [#tpu.dimension_semantics<parallel>], iteration_bounds = array<i64: 1>, scalar_prefetch = 0 : i64, scratch_operands = 0 : i64, tpu.core_type = #tpu.core_type<tc>, window_params = [{transform_indices = @transform_0, window_bounds = array<i64: 16, 1>}, {transform_indices = @transform_1, window_bounds = array<i64: 16, 1>}, {transform_indices = @transform_2, window_bounds = array<i64: 16, 1>}, {pipeline_mode = #tpu.pipeline_mode<synchronous>, transform_indices = @transform_3, window_bounds = array<i64: 64, 200>}, {pipeline_mode = #tpu.pipeline_mode<synchronous>, transform_indices = @transform_4, window_bounds = array<i64: 16, 200>}, {transform_indices = @transform_5, window_bounds = array<i64: 16, 1>}]} {
    %c0 = arith.constant 0 : index
    %c0_0 = arith.constant 0 : index
    %0 = vector.load %arg1[%c0, %c0_0] : memref<16x1xi32, #tpu.memory_space<vmem>>, vector<16x1xi32>
    %1 = tpu.iota {dimensions = array<i32: 1>} : vector<16x64xi32>
    %2 = vector.broadcast %0 : vector<16x1xi32> to vector<16x64xi32>
    %3 = arith.cmpi eq, %2, %1 : vector<16x64xi32>
    %4 = arith.extui %3 : vector<16x64xi1> to vector<16x64xi32>
    %5 = arith.sitofp %4 : vector<16x64xi32> to vector<16x64xf32>
    %c0_1 = arith.constant 0 : index
    %c0_2 = arith.constant 0 : index
    %6 = vector.load %arg4[%c0_1, %c0_2] : memref<64x200xf32, #tpu.memory_space<vmem>>, vector<64x200xf32>
    %cst = arith.constant dense<0.000000e+00> : vector<16x200xf32>
    %7 = tpu.matmul %5, %6, %cst {dimension_numbers = #tpu.dot_dimension_numbers<[1], [0], [0], [1], [0, 0, 1, 1], [], []>, precision = #tpu.contract_precision<fp32>} : vector<16x64xf32>, vector<64x200xf32>, vector<16x200xf32> -> vector<16x200xf32>
    %c0_3 = arith.constant 0 : index
    %c0_4 = arith.constant 0 : index
    %8 = vector.load %arg2[%c0_3, %c0_4] : memref<16x1xi32, #tpu.memory_space<vmem>>, vector<16x1xi32>
    %9 = tpu.iota {dimensions = array<i32: 1>} : vector<16x64xi32>
    %10 = vector.broadcast %8 : vector<16x1xi32> to vector<16x64xi32>
    %11 = arith.cmpi eq, %10, %9 : vector<16x64xi32>
    %12 = arith.extui %11 : vector<16x64xi1> to vector<16x64xi32>
    %13 = arith.sitofp %12 : vector<16x64xi32> to vector<16x64xf32>
    %c0_5 = arith.constant 0 : index
    %c0_6 = arith.constant 0 : index
    %14 = vector.load %arg4[%c0_5, %c0_6] : memref<64x200xf32, #tpu.memory_space<vmem>>, vector<64x200xf32>
    %cst_7 = arith.constant dense<0.000000e+00> : vector<16x200xf32>
    %15 = tpu.matmul %13, %14, %cst_7 {dimension_numbers = #tpu.dot_dimension_numbers<[1], [0], [0], [1], [0, 0, 1, 1], [], []>, precision = #tpu.contract_precision<fp32>} : vector<16x64xf32>, vector<64x200xf32>, vector<16x200xf32> -> vector<16x200xf32>
    %c0_8 = arith.constant 0 : index
    %c0_9 = arith.constant 0 : index
    %16 = vector.load %arg3[%c0_8, %c0_9] : memref<16x1xi32, #tpu.memory_space<vmem>>, vector<16x1xi32>
    %17 = tpu.iota {dimensions = array<i32: 1>} : vector<16x16xi32>
    %18 = vector.broadcast %16 : vector<16x1xi32> to vector<16x16xi32>
    %19 = arith.cmpi eq, %18, %17 : vector<16x16xi32>
    %20 = arith.extui %19 : vector<16x16xi1> to vector<16x16xi32>
    %21 = arith.sitofp %20 : vector<16x16xi32> to vector<16x16xf32>
    %c0_10 = arith.constant 0 : index
    %c0_11 = arith.constant 0 : index
    %22 = vector.load %arg5[%c0_10, %c0_11] : memref<16x200xf32, #tpu.memory_space<vmem>>, vector<16x200xf32>
    %cst_12 = arith.constant dense<0.000000e+00> : vector<16x200xf32>
    %23 = tpu.matmul %21, %22, %cst_12 {dimension_numbers = #tpu.dot_dimension_numbers<[1], [0], [0], [1], [0, 0, 1, 1], [], []>, precision = #tpu.contract_precision<fp32>} : vector<16x16xf32>, vector<16x200xf32>, vector<16x200xf32> -> vector<16x200xf32>
    %24 = arith.addf %7, %23 : vector<16x200xf32>
    %25 = arith.subf %24, %15 : vector<16x200xf32>
    %26 = math.absf %25 : vector<16x200xf32>
    %cst_13 = arith.constant dense<0.000000e+00> : vector<16xf32>
    %27 = vector.multi_reduction <add>, %26, %cst_13 [1] : vector<16x200xf32> to vector<16xf32>
    %28 = vector.shape_cast %27 : vector<16xf32> to vector<16x1xf32>
    %c0_14 = arith.constant 0 : index
    %c0_15 = arith.constant 0 : index
    %29 = vector.load %arg6[%c0_14, %c0_15] : memref<16x1xf32, #tpu.memory_space<vmem>>, vector<16x1xf32>
    tpu.vector_store %arg6[%c0_14, %c0_15], %28 {strides = array<i32>} : memref<16x1xf32, #tpu.memory_space<vmem>>, vector<16x1xf32>,
    return
  }
  func.func @transform_0(%arg0: i32) -> (i32, i32) {
    %c0_i32 = arith.constant 0 : i32
    %c0_i32_0 = arith.constant 0 : i32
    return %arg0, %c0_i32 : i32, i32
  }
  func.func @transform_1(%arg0: i32) -> (i32, i32) {
    %c0_i32 = arith.constant 0 : i32
    %c0_i32_0 = arith.constant 0 : i32
    return %arg0, %c0_i32 : i32, i32
  }
  func.func @transform_2(%arg0: i32) -> (i32, i32) {
    %c0_i32 = arith.constant 0 : i32
    %c0_i32_0 = arith.constant 0 : i32
    return %arg0, %c0_i32 : i32, i32
  }
  func.func @transform_3(%arg0: i32) -> (i32, i32) {
    %c0_i32 = arith.constant 0 : i32
    %c0_i32_0 = arith.constant 0 : i32
    %c0_i32_1 = arith.constant 0 : i32
    return %c0_i32, %c0_i32_0 : i32, i32
  }
  func.func @transform_4(%arg0: i32) -> (i32, i32) {
    %c0_i32 = arith.constant 0 : i32
    %c0_i32_0 = arith.constant 0 : i32
    %c0_i32_1 = arith.constant 0 : i32
    return %c0_i32, %c0_i32_0 : i32, i32
  }
  func.func @transform_5(%arg0: i32) -> (i32, i32) {
    %c0_i32 = arith.constant 0 : i32
    %c0_i32_0 = arith.constant 0 : i32
    return %arg0, %c0_i32 : i32, i32
  }
}

</mosaic_0001>

<llo_original>
// kernel: tpu_custom_call.1
$region0: #{tpu_custom_call.1}
  #allocation0 [shape = 'u32[]', space=smem, size = 0x4, offset = 0x4, fixed_abs, tag = 'smem constant byte address 0x4 - core index']
  #allocation1 [shape = 'u32[144,128]{1,0:T(1,128)}', space=vmem, size = 0x12000, scoped, tag = 'internal scratch']
  %s0 = inlined_call_operand.vmem [shape: s32[16,1], index: 0, kind: input, shape index: {}]
  %s1 = inlined_call_operand.vmem [shape: s32[16,1], index: 1, kind: input, shape index: {}]
  %s2 = inlined_call_operand.vmem [shape: s32[16,1], index: 2, kind: input, shape index: {}]
  %s3 = inlined_call_operand.hbm [shape: f32[64,200], index: 3, kind: input, shape index: {}]
  %s4 = inlined_call_operand.vmem [shape: f32[16,200], index: 4, kind: input, shape index: {}]
  %s5 = inlined_call_operand.vmem [shape: f32[16,1], index: 5, kind: output, shape index: {}]
  %s6 = sld [smem:[#allocation0]]
  $region34: #{tpu_custom_call.1} parent=0
    _
  %s8 = ssub.s32 1, %s6
  %s9 = scalar_select 0, %s8, %s6
  $region1: #{tpu_custom_call.1} parent=0
    #allocation2 [shape = 'u8[65536]{0}', space=vmem, size = 0x10000, scoped, tag = 'input window, operand 3, single buffered']
    #allocation3 [shape = 's32[1]{0}', space=sflag, size = 0x4, scoped, tag = 'scoped memory for tpu_custom_call.1']
    %10 = vsyncpa [#allocation3], 0
    // Predicated region
    $region2: #{tpu_custom_call.1} parent=1 // pred_check
      _
    $region3: #{tpu_custom_call.1} parent=1 // pred_check_branch
      %12 = sbr.rel (0) target = $region5
    $region4: #{tpu_custom_call.1} parent=1 // pred_region
      _
    $region5: #{tpu_custom_call.1} parent=1 // pred_fallthru
      _
    // Predicated region
    $region6: #{tpu_custom_call.1} parent=1 // pred_check
      _
    $region7: #{tpu_custom_call.1} parent=1 // pred_check_branch
      %14 = sbr.rel (0) target = $region9
    $region8: #{tpu_custom_call.1} parent=1 // pred_region
      _
    $region9: #{tpu_custom_call.1} parent=1 // pred_fallthru
      _
    // Predicated region
    $region10: #{tpu_custom_call.1} parent=1 // pred_check
      _
    $region11: #{tpu_custom_call.1} parent=1 // pred_check_branch
      %16 = sbr.rel (0) target = $region13
    $region12: #{tpu_custom_call.1} parent=1 // pred_region
      _
    $region13: #{tpu_custom_call.1} parent=1 // pred_fallthru
      _
    // Predicated region
    $region14: #{tpu_custom_call.1} parent=1 // pred_check
      _
    $region15: #{tpu_custom_call.1} parent=1 // pred_check_branch
      %18 = sbr.rel (0) target = $region17
    $region16: #{tpu_custom_call.1} parent=1 // pred_region
      %s20 = ssub.s32 2048, 2048
      %21 = vsyncadd [#allocation3], %s20
      %s22 = sshll.u32 [#allocation2], 4
      %s23 = int_to_ptr.vmem [resolvable:$true] %s22
      %28 = dma.hbm_to_vmem [thread:$0]  %s3, 2048, %s23, [#allocation3], 256, 256, 16
    $region17: #{tpu_custom_call.1} parent=1 // pred_fallthru
      _
    // Predicated region
    $region18: #{tpu_custom_call.1} parent=1 // pred_check
      _
    $region19: #{tpu_custom_call.1} parent=1 // pred_check_branch
      %30 = sbr.rel (0) target = $region21
    $region20: #{tpu_custom_call.1} parent=1 // pred_region
      _
    $region21: #{tpu_custom_call.1} parent=1 // pred_fallthru
      _
    // Predicated region
    $region22: #{tpu_custom_call.1} parent=1 // pred_check
      _
    $region23: #{tpu_custom_call.1} parent=1 // pred_check_branch
      %32 = sbr.rel (0) target = $region25
    $region24: #{tpu_custom_call.1} parent=1 // pred_region
      %33 = dma.done [#allocation3], 2048
    $region25: #{tpu_custom_call.1} parent=1 // pred_fallthru
      _
    %v34 = vld [vmem:[%s0] sm:$0xff]
    %v35 = vld [vmem:[%s0 + $0x8] sm:$0xff]
    %v36 = vlaneseq
    %v37 = vand.u32 %v36, 127
    %38 = vset.pattern.permute.xlu0 0
    %39 = vperm.xlu0 %38, %v34
    %v40 = vpop.permute.xlu0 %39
    %41 = vset.pattern.permute.xlu0 0
    %42 = vperm.xlu0 %41, %v35
    %v43 = vpop.permute.xlu0 %42
    %vm44 = vcmp.eq.s32.totalorder %v40, %v37
    %vm45 = vcmp.eq.s32.totalorder %v43, %v37
    %v46 = vsel %vm44, 1, 0
    %v47 = vsel %vm45, 1, 0
    %v48 = vcvt.s32.f32 %v46
    %v49 = vcvt.s32.f32 %v47
    %v50 = vld [vmem:[#allocation2] sm:$0xff]
    %v51 = vld [vmem:[#allocation2 + $0x8] sm:$0xff]
    %v52 = vld [vmem:[#allocation2 + $0x10] sm:$0xff]
    %v53 = vld [vmem:[#allocation2 + $0x18] sm:$0xff]
    %v54 = vld [vmem:[#allocation2 + $0x20] sm:$0xff]
    %v55 = vld [vmem:[#allocation2 + $0x28] sm:$0xff]
    %v56 = vld [vmem:[#allocation2 + $0x30] sm:$0xff]
    %v57 = vld [vmem:[#allocation2 + $0x38] sm:$0xff]
    %v58 = vld [vmem:[#allocation2 + $0x40] sm:$0xff]
    %v59 = vld [vmem:[#allocation2 + $0x48] sm:$0xff]
    %v60 = vld [vmem:[#allocation2 + $0x50] sm:$0xff]
    %v61 = vld [vmem:[#allocation2 + $0x58] sm:$0xff]
    %v62 = vld [vmem:[#allocation2 + $0x60] sm:$0xff]
    %v63 = vld [vmem:[#allocation2 + $0x68] sm:$0xff]
    %v64 = vld [vmem:[#allocation2 + $0x70] sm:$0xff]
    %v65 = vld [vmem:[#allocation2 + $0x78] sm:$0xff]
    %v66 = vld [vmem:[%s1] sm:$0xff]
    %v67 = vld [vmem:[%s1 + $0x8] sm:$0xff]
    %68 = vset.pattern.permute.xlu0 0
    %69 = vperm.xlu0 %68, %v66
    %v70 = vpop.permute.xlu0 %69
    %71 = vset.pattern.permute.xlu0 0
    %72 = vperm.xlu0 %71, %v67
    %v73 = vpop.permute.xlu0 %72
    %vm74 = vcmp.eq.s32.totalorder %v70, %v37
    %vm75 = vcmp.eq.s32.totalorder %v73, %v37
    %v76 = vsel %vm74, 1, 0
    %v77 = vsel %vm75, 1, 0
    %v78 = vcvt.s32.f32 %v76
    %v79 = vcvt.s32.f32 %v77
    %vm80 = vcmask 523264
    %v82 = vsel %vm80, %v78, 0
    %v85 = vsel %vm80, %v79, 0
    %87 = vmatprep.subr.mxu0 0.0
    %88 = vmatpush1.msra.mxu0 0.0
    %89 = vmatprep.subr.mxu0 0.0
    %90 = vmatpush1.msra.mxu0 0.0
    %91 = vmatprep.subr.mxu0 0.0
    %92 = vmatpush1.msra.mxu0 0.0
    %93 = vmatprep.subr.mxu0 0.0
    %94 = vmatpush1.msra.mxu0 0.0
    %95 = vmatprep.subr.mxu0 0.0
    %96 = vmatpush1.msra.mxu0 0.0
    %97 = vmatprep.subr.mxu0 0.0
    %98 = vmatpush1.msra.mxu0 0.0
    %99 = vmatprep.subr.mxu0 0.0
    %100 = vmatpush1.msra.mxu0 0.0
    %101 = vmatprep.subr.mxu0 0.0
    %102 = vmatpush1.msra.mxu0 0.0
    %v103 = vand.u32 %v65, 4294901760
    %104 = vmatprep.subr.mxu0 %v103
    %v105 = vand.u32 %v64, 4294901760
    %106 = vmatpush1.msra.mxu0 %v105
    %v107 = vand.u32 %v63, 4294901760
    %108 = vmatprep.subr.mxu0 %v107
    %v109 = vand.u32 %v62, 4294901760
    %110 = vmatpush1.msra.mxu0 %v109
    %v111 = vand.u32 %v61, 4294901760
    %112 = vmatprep.subr.mxu0 %v111
    %v113 = vand.u32 %v60, 4294901760
    %114 = vmatpush1.msra.mxu0 %v113
    %v115 = vand.u32 %v59, 4294901760
    %116 = vmatprep.subr.mxu0 %v115
    %v117 = vand.u32 %v58, 4294901760
    %118 = vmatpush1.msra.mxu0 %v117
    %v119 = vand.u32 %v57, 4294901760
    %120 = vmatprep.subr.mxu0 %v119
    %v121 = vand.u32 %v56, 4294901760
    %122 = vmatpush1.msra.mxu0 %v121
    %v123 = vand.u32 %v55, 4294901760
    %124 = vmatprep.subr.mxu0 %v123
    %v125 = vand.u32 %v54, 4294901760
    %126 = vmatpush1.msra.mxu0 %v125
    %v127 = vand.u32 %v53, 4294901760
    %128 = vmatprep.subr.mxu0 %v127
    %v129 = vand.u32 %v52, 4294901760
    %130 = vmatpush1.msra.mxu0 %v129
    %v131 = vand.u32 %v51, 4294901760
    %132 = vmatprep.subr.mxu0 %v131
    %v133 = vand.u32 %v50, 4294901760
    %134 = vmatpush1.msra.mxu0 %v133
    %135 = vmatprep.subr.mxu0 0.0
    %136 = vmatpush2.msra.mxu0 0.0
    %137 = vmatprep.subr.mxu0 0.0
    %138 = vmatpush2.msra.mxu0 0.0
    %139 = vmatprep.subr.mxu0 0.0
    %140 = vmatpush2.msra.mxu0 0.0
    %141 = vmatprep.subr.mxu0 0.0
    %142 = vmatpush2.msra.mxu0 0.0
    %143 = vmatprep.subr.mxu0 0.0
    %144 = vmatpush2.msra.mxu0 0.0
    %145 = vmatprep.subr.mxu0 0.0
    %146 = vmatpush2.msra.mxu0 0.0
    %147 = vmatprep.subr.mxu0 0.0
    %148 = vmatpush2.msra.mxu0 0.0
    %149 = vmatprep.subr.mxu0 0.0
    %150 = vmatpush2.msra.mxu0 0.0
    %151 = vmatprep.subr.mxu0 0.0
    %152 = vmatpush2.msra.mxu0 0.0
    %153 = vmatprep.subr.mxu0 0.0
    %154 = vmatpush2.msra.mxu0 0.0
    %155 = vmatprep.subr.mxu0 0.0
    %156 = vmatpush2.msra.mxu0 0.0
    %157 = vmatprep.subr.mxu0 0.0
    %158 = vmatpush2.msra.mxu0 0.0
    %159 = vmatprep.subr.mxu0 0.0
    %160 = vmatpush2.msra.mxu0 0.0
    %161 = vmatprep.subr.mxu0 0.0
    %162 = vmatpush2.msra.mxu0 0.0
    %163 = vmatprep.subr.mxu0 0.0
    %164 = vmatpush2.msra.mxu0 0.0
    %165 = vmatprep.subr.mxu0 0.0
    %166 = vmatpush2.msra.mxu0 0.0
    %167 = vmatprep.mubr.f32.mxu0 0.0
    %v168 = vand.u32 %v82, 4294901760
    %v169 = vsub.f32 %v82, %v168
    %v170 = vand.u32 %v169, 4294901760
    %v171 = vsub.f32 %v169, %v170
    %v172 = vand.u32 %v171, 4294901760
    %173 = vmatmul.mubr.f32.gmra.mxu0 %v172
    %v174 = vpop.f32.mrf.mxu0
    %v175 = vadd.f32 0.0, %v174
    %v176 = vpop.f32.mrf.mxu0
    %v177 = vadd.f32 0.0, %v176
    %178 = vmatprep.mubr.f32.mxu0 0.0
    %v179 = vand.u32 %v85, 4294901760
    %v180 = vsub.f32 %v85, %v179
    %v181 = vand.u32 %v180, 4294901760
    %v182 = vsub.f32 %v180, %v181
    %v183 = vand.u32 %v182, 4294901760
    %184 = vmatmul.mubr.f32.gmra.mxu0 %v183
    %v185 = vpop.f32.mrf.mxu0
    %v186 = vadd.f32 0.0, %v185
    %v187 = vpop.f32.mrf.mxu0
    %v188 = vadd.f32 0.0, %v187
    %189 = vdwg.mxu0
    %190 = vmatprep.subr.mxu0 0.0
    %191 = vmatpush1.msra.mxu0 0.0
    %192 = vmatprep.subr.mxu0 0.0
    %193 = vmatpush1.msra.mxu0 0.0
    %194 = vmatprep.subr.mxu0 0.0
    %195 = vmatpush1.msra.mxu0 0.0
    %196 = vmatprep.subr.mxu0 0.0
    %197 = vmatpush1.msra.mxu0 0.0
    %198 = vmatprep.subr.mxu0 0.0
    %199 = vmatpush1.msra.mxu0 0.0
    %200 = vmatprep.subr.mxu0 0.0
    %201 = vmatpush1.msra.mxu0 0.0
    %202 = vmatprep.subr.mxu0 0.0
    %203 = vmatpush1.msra.mxu0 0.0
    %204 = vmatprep.subr.mxu0 0.0
    %205 = vmatpush1.msra.mxu0 0.0
    %v206 = vand.u32 %v65, 4294901760
    %v207 = vsub.f32 %v65, %v206
    %v208 = vand.u32 %v207, 4294901760
    %v209 = vsub.f32 %v207, %v208
    %v210 = vand.u32 %v209, 4294901760
    %211 = vmatprep.subr.mxu0 %v210
    %v212 = vand.u32 %v64, 4294901760
    %v213 = vsub.f32 %v64, %v212
    %v214 = vand.u32 %v213, 4294901760
    %v215 = vsub.f32 %v213, %v214
    %v216 = vand.u32 %v215, 4294901760
    %217 = vmatpush1.msra.mxu0 %v216
    %v218 = vand.u32 %v63, 4294901760
    %v219 = vsub.f32 %v63, %v218
    %v220 = vand.u32 %v219, 4294901760
    %v221 = vsub.f32 %v219, %v220
    %v222 = vand.u32 %v221, 4294901760
    %223 = vmatprep.subr.mxu0 %v222
    %v224 = vand.u32 %v62, 4294901760
    %v225 = vsub.f32 %v62, %v224
    %v226 = vand.u32 %v225, 4294901760
    %v227 = vsub.f32 %v225, %v226
    %v228 = vand.u32 %v227, 4294901760
    %229 = vmatpush1.msra.mxu0 %v228
    %v230 = vand.u32 %v61, 4294901760
    %v231 = vsub.f32 %v61, %v230
    %v232 = vand.u32 %v231, 4294901760
    %v233 = vsub.f32 %v231, %v232
    %v234 = vand.u32 %v233, 4294901760
    %235 = vmatprep.subr.mxu0 %v234
    %v236 = vand.u32 %v60, 4294901760
    %v237 = vsub.f32 %v60, %v236
    %v238 = vand.u32 %v237, 4294901760
    %v239 = vsub.f32 %v237, %v238
    %v240 = vand.u32 %v239, 4294901760
    %241 = vmatpush1.msra.mxu0 %v240
    %v242 = vand.u32 %v59, 4294901760
    %v243 = vsub.f32 %v59, %v242
    %v244 = vand.u32 %v243, 4294901760
    %v245 = vsub.f32 %v243, %v244
    %v246 = vand.u32 %v245, 4294901760
    %247 = vmatprep.subr.mxu0 %v246
    %v248 = vand.u32 %v58, 4294901760
    %v249 = vsub.f32 %v58, %v248
    %v250 = vand.u32 %v249, 4294901760
    %v251 = vsub.f32 %v249, %v250
    %v252 = vand.u32 %v251, 4294901760
    %253 = vmatpush1.msra.mxu0 %v252
    %v254 = vand.u32 %v57, 4294901760
    %v255 = vsub.f32 %v57, %v254
    %v256 = vand.u32 %v255, 4294901760
    %v257 = vsub.f32 %v255, %v256
    %v258 = vand.u32 %v257, 4294901760
    %259 = vmatprep.subr.mxu0 %v258
    %v260 = vand.u32 %v56, 4294901760
    %v261 = vsub.f32 %v56, %v260
    %v262 = vand.u32 %v261, 4294901760
    %v263 = vsub.f32 %v261, %v262
    %v264 = vand.u32 %v263, 4294901760
    %265 = vmatpush1.msra.mxu0 %v264
    %v266 = vand.u32 %v55, 4294901760
    %v267 = vsub.f32 %v55, %v266
    %v268 = vand.u32 %v267, 4294901760
    %v269 = vsub.f32 %v267, %v268
    %v270 = vand.u32 %v269, 4294901760
    %271 = vmatprep.subr.mxu0 %v270
    %v272 = vand.u32 %v54, 4294901760
    %v273 = vsub.f32 %v54, %v272
    %v274 = vand.u32 %v273, 4294901760
    %v275 = vsub.f32 %v273, %v274
    %v276 = vand.u32 %v275, 4294901760
    %277 = vmatpush1.msra.mxu0 %v276
    %v278 = vand.u32 %v53, 4294901760
    %v279 = vsub.f32 %v53, %v278
    %v280 = vand.u32 %v279, 4294901760
    %v281 = vsub.f32 %v279, %v280
    %v282 = vand.u32 %v281, 4294901760
    %283 = vmatprep.subr.mxu0 %v282
    %v284 = vand.u32 %v52, 4294901760
    %v285 = vsub.f32 %v52, %v284
    %v286 = vand.u32 %v285, 4294901760
    %v287 = vsub.f32 %v285, %v286
    %v288 = vand.u32 %v287, 4294901760
    %289 = vmatpush1.msra.mxu0 %v288
    %v290 = vand.u32 %v51, 4294901760
    %v291 = vsub.f32 %v51, %v290
    %v292 = vand.u32 %v291, 4294901760
    %v293 = vsub.f32 %v291, %v292
    %v294 = vand.u32 %v293, 4294901760
    %295 = vmatprep.subr.mxu0 %v294
    %v296 = vand.u32 %v50, 4294901760
    %v297 = vsub.f32 %v50, %v296
    %v298 = vand.u32 %v297, 4294901760
    %v299 = vsub.f32 %v297, %v298
    %v300 = vand.u32 %v299, 4294901760
    %301 = vmatpush1.msra.mxu0 %v300
    %302 = vmatprep.subr.mxu0 0.0
    %303 = vmatpush2.msra.mxu0 0.0
    %304 = vmatprep.subr.mxu0 0.0
    %305 = vmatpush2.msra.mxu0 0.0
    %306 = vmatprep.subr.mxu0 0.0
    %307 = vmatpush2.msra.mxu0 0.0
    %308 = vmatprep.subr.mxu0 0.0
    %309 = vmatpush2.msra.mxu0 0.0
    %310 = vmatprep.subr.mxu0 0.0
    %311 = vmatpush2.msra.mxu0 0.0
    %312 = vmatprep.subr.mxu0 0.0
    %313 = vmatpush2.msra.mxu0 0.0
    %314 = vmatprep.subr.mxu0 0.0
    %315 = vmatpush2.msra.mxu0 0.0
    %316 = vmatprep.subr.mxu0 0.0
    %317 = vmatpush2.msra.mxu0 0.0
    %318 = vmatprep.subr.mxu0 0.0
    %319 = vmatpush2.msra.mxu0 0.0
    %320 = vmatprep.subr.mxu0 0.0
    %321 = vmatpush2.msra.mxu0 0.0
    %322 = vmatprep.subr.mxu0 0.0
    %323 = vmatpush2.msra.mxu0 0.0
    %324 = vmatprep.subr.mxu0 0.0
    %325 = vmatpush2.msra.mxu0 0.0
    %326 = vmatprep.subr.mxu0 0.0
    %327 = vmatpush2.msra.mxu0 0.0
    %328 = vmatprep.subr.mxu0 0.0
    %329 = vmatpush2.msra.mxu0 0.0
    %330 = vmatprep.subr.mxu0 0.0
    %331 = vmatpush2.msra.mxu0 0.0
    %332 = vmatprep.subr.mxu0 0.0
    %333 = vmatpush2.msra.mxu0 0.0
    %334 = vmatprep.mubr.f32.mxu0 0.0
    %v335 = vand.u32 %v82, 4294901760
    %336 = vmatmul.mubr.f32.gmra.mxu0 %v335
    %v337 = vpop.f32.mrf.mxu0
    %v338 = vadd.f32 %v175, %v337
    %v339 = vpop.f32.mrf.mxu0
    %v340 = vadd.f32 %v177, %v339
    %341 = vmatprep.mubr.f32.mxu0 0.0
    %v342 = vand.u32 %v85, 4294901760
    %343 = vmatmul.mubr.f32.gmra.mxu0 %v342
    %v344 = vpop.f32.mrf.mxu0
    %v345 = vadd.f32 %v186, %v344
    %v346 = vpop.f32.mrf.mxu0
    %v347 = vadd.f32 %v188, %v346
    %348 = vdwg.mxu0
    %349 = vmatprep.subr.mxu0 0.0
    %350 = vmatpush1.msra.mxu0 0.0
    %351 = vmatprep.subr.mxu0 0.0
    %352 = vmatpush1.msra.mxu0 0.0
    %353 = vmatprep.subr.mxu0 0.0
    %354 = vmatpush1.msra.mxu0 0.0
    %355 = vmatprep.subr.mxu0 0.0
    %356 = vmatpush1.msra.mxu0 0.0
    %357 = vmatprep.subr.mxu0 0.0
    %358 = vmatpush1.msra.mxu0 0.0
    %359 = vmatprep.subr.mxu0 0.0
    %360 = vmatpush1.msra.mxu0 0.0
    %361 = vmatprep.subr.mxu0 0.0
    %362 = vmatpush1.msra.mxu0 0.0
    %363 = vmatprep.subr.mxu0 0.0
    %364 = vmatpush1.msra.mxu0 0.0
    %v365 = vand.u32 %v65, 4294901760
    %v366 = vsub.f32 %v65, %v365
    %367 = vmatprep.subr.mxu0 %v366
    %v368 = vand.u32 %v64, 4294901760
    %v369 = vsub.f32 %v64, %v368
    %370 = vmatpush1.msra.mxu0 %v369
    %v371 = vand.u32 %v63, 4294901760
    %v372 = vsub.f32 %v63, %v371
    %373 = vmatprep.subr.mxu0 %v372
    %v374 = vand.u32 %v62, 4294901760
    %v375 = vsub.f32 %v62, %v374
    %376 = vmatpush1.msra.mxu0 %v375
    %v377 = vand.u32 %v61, 4294901760
    %v378 = vsub.f32 %v61, %v377
    %379 = vmatprep.subr.mxu0 %v378
    %v380 = vand.u32 %v60, 4294901760
    %v381 = vsub.f32 %v60, %v380
    %382 = vmatpush1.msra.mxu0 %v381
    %v383 = vand.u32 %v59, 4294901760
    %v384 = vsub.f32 %v59, %v383
    %385 = vmatprep.subr.mxu0 %v384
    %v386 = vand.u32 %v58, 4294901760
    %v387 = vsub.f32 %v58, %v386
    %388 = vmatpush1.msra.mxu0 %v387
    %v389 = vand.u32 %v57, 4294901760
    %v390 = vsub.f32 %v57, %v389
    %391 = vmatprep.subr.mxu0 %v390
    %v392 = vand.u32 %v56, 4294901760
    %v393 = vsub.f32 %v56, %v392
    %394 = vmatpush1.msra.mxu0 %v393
    %v395 = vand.u32 %v55, 4294901760
    %v396 = vsub.f32 %v55, %v395
    %397 = vmatprep.subr.mxu0 %v396
    %v398 = vand.u32 %v54, 4294901760
    %v399 = vsub.f32 %v54, %v398
    %400 = vmatpush1.msra.mxu0 %v399
    %v401 = vand.u32 %v53, 4294901760
    %v402 = vsub.f32 %v53, %v401
    %403 = vmatprep.subr.mxu0 %v402
    %v404 = vand.u32 %v52, 4294901760
    %v405 = vsub.f32 %v52, %v404
    %406 = vmatpush1.msra.mxu0 %v405
    %v407 = vand.u32 %v51, 4294901760
    %v408 = vsub.f32 %v51, %v407
    %409 = vmatprep.subr.mxu0 %v408
    %v410 = vand.u32 %v50, 4294901760
    %v411 = vsub.f32 %v50, %v410
    %412 = vmatpush1.msra.mxu0 %v411
    %413 = vmatprep.subr.mxu0 0.0
    %414 = vmatpush2.msra.mxu0 0.0
    %415 = vmatprep.subr.mxu0 0.0
    %416 = vmatpush2.msra.mxu0 0.0
    %417 = vmatprep.subr.mxu0 0.0
    %418 = vmatpush2.msra.mxu0 0.0
    %419 = vmatprep.subr.mxu0 0.0
    %420 = vmatpush2.msra.mxu0 0.0
    %421 = vmatprep.subr.mxu0 0.0
    %422 = vmatpush2.msra.mxu0 0.0
    %423 = vmatprep.subr.mxu0 0.0
    %424 = vmatpush2.msra.mxu0 0.0
    %425 = vmatprep.subr.mxu0 0.0
    %426 = vmatpush2.msra.mxu0 0.0
    %427 = vmatprep.subr.mxu0 0.0
    %428 = vmatpush2.msra.mxu0 0.0
    %429 = vmatprep.subr.mxu0 0.0
    %430 = vmatpush2.msra.mxu0 0.0
    %431 = vmatprep.subr.mxu0 0.0
    %432 = vmatpush2.msra.mxu0 0.0
    %433 = vmatprep.subr.mxu0 0.0
    %434 = vmatpush2.msra.mxu0 0.0
    %435 = vmatprep.subr.mxu0 0.0
    %436 = vmatpush2.msra.mxu0 0.0
    %437 = vmatprep.subr.mxu0 0.0
    %438 = vmatpush2.msra.mxu0 0.0
    %439 = vmatprep.subr.mxu0 0.0
    %440 = vmatpush2.msra.mxu0 0.0
    %441 = vmatprep.subr.mxu0 0.0
    %442 = vmatpush2.msra.mxu0 0.0
    %443 = vmatprep.subr.mxu0 0.0
    %444 = vmatpush2.msra.mxu0 0.0
    %445 = vmatprep.mubr.f32.mxu0 0.0
    %v446 = vand.u32 %v82, 4294901760
    %v447 = vsub.f32 %v82, %v446
    %448 = vmatmul.mubr.f32.gmra.mxu0 %v447
    %v449 = vpop.f32.mrf.mxu0
    %v450 = vadd.f32 %v338, %v449
    %v451 = vpop.f32.mrf.mxu0
    %v452 = vadd.f32 %v340, %v451
    %453 = vmatprep.mubr.f32.mxu0 0.0
    %v454 = vand.u32 %v85, 4294901760
    %v455 = vsub.f32 %v85, %v454
    %456 = vmatmul.mubr.f32.gmra.mxu0 %v455
    %v457 = vpop.f32.mrf.mxu0
    %v458 = vadd.f32 %v345, %v457
    %v459 = vpop.f32.mrf.mxu0
    %v460 = vadd.f32 %v347, %v459
    %461 = vdwg.mxu0
    %462 = vmatprep.subr.mxu0 0.0
    %463 = vmatpush1.msra.mxu0 0.0
    %464 = vmatprep.subr.mxu0 0.0
    %465 = vmatpush1.msra.mxu0 0.0
    %466 = vmatprep.subr.mxu0 0.0
    %467 = vmatpush1.msra.mxu0 0.0
    %468 = vmatprep.subr.mxu0 0.0
    %469 = vmatpush1.msra.mxu0 0.0
    %470 = vmatprep.subr.mxu0 0.0
    %471 = vmatpush1.msra.mxu0 0.0
    %472 = vmatprep.subr.mxu0 0.0
    %473 = vmatpush1.msra.mxu0 0.0
    %474 = vmatprep.subr.mxu0 0.0
    %475 = vmatpush1.msra.mxu0 0.0
    %476 = vmatprep.subr.mxu0 0.0
    %477 = vmatpush1.msra.mxu0 0.0
    %v478 = vand.u32 %v65, 4294901760
    %479 = vmatprep.subr.mxu0 %v478
    %v480 = vand.u32 %v64, 4294901760
    %481 = vmatpush1.msra.mxu0 %v480
    %v482 = vand.u32 %v63, 4294901760
    %483 = vmatprep.subr.mxu0 %v482
    %v484 = vand.u32 %v62, 4294901760
    %485 = vmatpush1.msra.mxu0 %v484
    %v486 = vand.u32 %v61, 4294901760
    %487 = vmatprep.subr.mxu0 %v486
    %v488 = vand.u32 %v60, 4294901760
    %489 = vmatpush1.msra.mxu0 %v488
    %v490 = vand.u32 %v59, 4294901760
    %491 = vmatprep.subr.mxu0 %v490
    %v492 = vand.u32 %v58, 4294901760
    %493 = vmatpush1.msra.mxu0 %v492
    %v494 = vand.u32 %v57, 4294901760
    %495 = vmatprep.subr.mxu0 %v494
    %v496 = vand.u32 %v56, 4294901760
    %497 = vmatpush1.msra.mxu0 %v496
    %v498 = vand.u32 %v55, 4294901760
    %499 = vmatprep.subr.mxu0 %v498
    %v500 = vand.u32 %v54, 4294901760
    %501 = vmatpush1.msra.mxu0 %v500
    %v502 = vand.u32 %v53, 4294901760
    %503 = vmatprep.subr.mxu0 %v502
    %v504 = vand.u32 %v52, 4294901760
    %505 = vmatpush1.msra.mxu0 %v504
    %v506 = vand.u32 %v51, 4294901760
    %507 = vmatprep.subr.mxu0 %v506
    %v508 = vand.u32 %v50, 4294901760
    %509 = vmatpush1.msra.mxu0 %v508
    %510 = vmatprep.subr.mxu0 0.0
    %511 = vmatpush2.msra.mxu0 0.0
    %512 = vmatprep.subr.mxu0 0.0
    %513 = vmatpush2.msra.mxu0 0.0
    %514 = vmatprep.subr.mxu0 0.0
    %515 = vmatpush2.msra.mxu0 0.0
    %516 = vmatprep.subr.mxu0 0.0
    %517 = vmatpush2.msra.mxu0 0.0
    %518 = vmatprep.subr.mxu0 0.0
    %519 = vmatpush2.msra.mxu0 0.0
    %520 = vmatprep.subr.mxu0 0.0
    %521 = vmatpush2.msra.mxu0 0.0
    %522 = vmatprep.subr.mxu0 0.0
    %523 = vmatpush2.msra.mxu0 0.0
    %524 = vmatprep.subr.mxu0 0.0
    %525 = vmatpush2.msra.mxu0 0.0
    %526 = vmatprep.subr.mxu0 0.0
    %527 = vmatpush2.msra.mxu0 0.0
    %528 = vmatprep.subr.mxu0 0.0
    %529 = vmatpush2.msra.mxu0 0.0
    %530 = vmatprep.subr.mxu0 0.0
    %531 = vmatpush2.msra.mxu0 0.0
    %532 = vmatprep.subr.mxu0 0.0
    %533 = vmatpush2.msra.mxu0 0.0
    %534 = vmatprep.subr.mxu0 0.0
    %535 = vmatpush2.msra.mxu0 0.0
    %536 = vmatprep.subr.mxu0 0.0
    %537 = vmatpush2.msra.mxu0 0.0
    %538 = vmatprep.subr.mxu0 0.0
    %539 = vmatpush2.msra.mxu0 0.0
    %540 = vmatprep.subr.mxu0 0.0
    %541 = vmatpush2.msra.mxu0 0.0
    %542 = vmatprep.mubr.f32.mxu0 0.0
    %v543 = vand.u32 %v82, 4294901760
    %v544 = vsub.f32 %v82, %v543
    %v545 = vand.u32 %v544, 4294901760
    %546 = vmatmul.mubr.f32.gmra.mxu0 %v545
    %v547 = vpop.f32.mrf.mxu0
    %v548 = vadd.f32 %v450, %v547
    %v549 = vpop.f32.mrf.mxu0
    %v550 = vadd.f32 %v452, %v549
    %551 = vmatprep.mubr.f32.mxu0 0.0
    %v552 = vand.u32 %v85, 4294901760
    %v553 = vsub.f32 %v85, %v552
    %v554 = vand.u32 %v553, 4294901760
    %555 = vmatmul.mubr.f32.gmra.mxu0 %v554
    %v556 = vpop.f32.mrf.mxu0
    %v557 = vadd.f32 %v458, %v556
    %v558 = vpop.f32.mrf.mxu0
    %v559 = vadd.f32 %v460, %v558
    %560 = vdwg.mxu0
    %561 = vmatprep.subr.mxu0 0.0
    %562 = vmatpush1.msra.mxu0 0.0
    %563 = vmatprep.subr.mxu0 0.0
    %564 = vmatpush1.msra.mxu0 0.0
    %565 = vmatprep.subr.mxu0 0.0
    %566 = vmatpush1.msra.mxu0 0.0
    %567 = vmatprep.subr.mxu0 0.0
    %568 = vmatpush1.msra.mxu0 0.0
    %569 = vmatprep.subr.mxu0 0.0
    %570 = vmatpush1.msra.mxu0 0.0
    %571 = vmatprep.subr.mxu0 0.0
    %572 = vmatpush1.msra.mxu0 0.0
    %573 = vmatprep.subr.mxu0 0.0
    %574 = vmatpush1.msra.mxu0 0.0
    %575 = vmatprep.subr.mxu0 0.0
    %576 = vmatpush1.msra.mxu0 0.0
    %v577 = vand.u32 %v65, 4294901760
    %v578 = vsub.f32 %v65, %v577
    %v579 = vand.u32 %v578, 4294901760
    %580 = vmatprep.subr.mxu0 %v579
    %v581 = vand.u32 %v64, 4294901760
    %v582 = vsub.f32 %v64, %v581
    %v583 = vand.u32 %v582, 4294901760
    %584 = vmatpush1.msra.mxu0 %v583
    %v585 = vand.u32 %v63, 4294901760
    %v586 = vsub.f32 %v63, %v585
    %v587 = vand.u32 %v586, 4294901760
    %588 = vmatprep.subr.mxu0 %v587
    %v589 = vand.u32 %v62, 4294901760
    %v590 = vsub.f32 %v62, %v589
    %v591 = vand.u32 %v590, 4294901760
    %592 = vmatpush1.msra.mxu0 %v591
    %v593 = vand.u32 %v61, 4294901760
    %v594 = vsub.f32 %v61, %v593
    %v595 = vand.u32 %v594, 4294901760
    %596 = vmatprep.subr.mxu0 %v595
    %v597 = vand.u32 %v60, 4294901760
    %v598 = vsub.f32 %v60, %v597
    %v599 = vand.u32 %v598, 4294901760
    %600 = vmatpush1.msra.mxu0 %v599
    %v601 = vand.u32 %v59, 4294901760
    %v602 = vsub.f32 %v59, %v601
    %v603 = vand.u32 %v602, 4294901760
    %604 = vmatprep.subr.mxu0 %v603
    %v605 = vand.u32 %v58, 4294901760
    %v606 = vsub.f32 %v58, %v605
    %v607 = vand.u32 %v606, 4294901760
    %608 = vmatpush1.msra.mxu0 %v607
    %v609 = vand.u32 %v57, 4294901760
    %v610 = vsub.f32 %v57, %v609
    %v611 = vand.u32 %v610, 4294901760
    %612 = vmatprep.subr.mxu0 %v611
    %v613 = vand.u32 %v56, 4294901760
    %v614 = vsub.f32 %v56, %v613
    %v615 = vand.u32 %v614, 4294901760
    %616 = vmatpush1.msra.mxu0 %v615
    %v617 = vand.u32 %v55, 4294901760
    %v618 = vsub.f32 %v55, %v617
    %v619 = vand.u32 %v618, 4294901760
    %620 = vmatprep.subr.mxu0 %v619
    %v621 = vand.u32 %v54, 4294901760
    %v622 = vsub.f32 %v54, %v621
    %v623 = vand.u32 %v622, 4294901760
    %624 = vmatpush1.msra.mxu0 %v623
    %v625 = vand.u32 %v53, 4294901760
    %v626 = vsub.f32 %v53, %v625
    %v627 = vand.u32 %v626, 4294901760
    %628 = vmatprep.subr.mxu0 %v627
    %v629 = vand.u32 %v52, 4294901760
    %v630 = vsub.f32 %v52, %v629
    %v631 = vand.u32 %v630, 4294901760
    %632 = vmatpush1.msra.mxu0 %v631
    %v633 = vand.u32 %v51, 4294901760
    %v634 = vsub.f32 %v51, %v633
    %v635 = vand.u32 %v634, 4294901760
    %636 = vmatprep.subr.mxu0 %v635
    %v637 = vand.u32 %v50, 4294901760
    %v638 = vsub.f32 %v50, %v637
    %v639 = vand.u32 %v638, 4294901760
    %640 = vmatpush1.msra.mxu0 %v639
    %641 = vmatprep.subr.mxu0 0.0
    %642 = vmatpush2.msra.mxu0 0.0
    %643 = vmatprep.subr.mxu0 0.0
    %644 = vmatpush2.msra.mxu0 0.0
    %645 = vmatprep.subr.mxu0 0.0
    %646 = vmatpush2.msra.mxu0 0.0
    %647 = vmatprep.subr.mxu0 0.0
    %648 = vmatpush2.msra.mxu0 0.0
    %649 = vmatprep.subr.mxu0 0.0
    %650 = vmatpush2.msra.mxu0 0.0
    %651 = vmatprep.subr.mxu0 0.0
    %652 = vmatpush2.msra.mxu0 0.0
    %653 = vmatprep.subr.mxu0 0.0
    %654 = vmatpush2.msra.mxu0 0.0
    %655 = vmatprep.subr.mxu0 0.0
    %656 = vmatpush2.msra.mxu0 0.0
    %657 = vmatprep.subr.mxu0 0.0
    %658 = vmatpush2.msra.mxu0 0.0
    %659 = vmatprep.subr.mxu0 0.0
    %660 = vmatpush2.msra.mxu0 0.0
    %661 = vmatprep.subr.mxu0 0.0
    %662 = vmatpush2.msra.mxu0 0.0
    %663 = vmatprep.subr.mxu0 0.0
    %664 = vmatpush2.msra.mxu0 0.0
    %665 = vmatprep.subr.mxu0 0.0
    %666 = vmatpush2.msra.mxu0 0.0
    %667 = vmatprep.subr.mxu0 0.0
    %668 = vmatpush2.msra.mxu0 0.0
    %669 = vmatprep.subr.mxu0 0.0
    %670 = vmatpush2.msra.mxu0 0.0
    %671 = vmatprep.subr.mxu0 0.0
    %672 = vmatpush2.msra.mxu0 0.0
    %673 = vmatprep.mubr.f32.mxu0 0.0
    %v674 = vand.u32 %v82, 4294901760
    %675 = vmatmul.mubr.f32.gmra.mxu0 %v674
    %v676 = vpop.f32.mrf.mxu0
    %v677 = vadd.f32 %v548, %v676
    %v678 = vpop.f32.mrf.mxu0
    %v679 = vadd.f32 %v550, %v678
    %680 = vmatprep.mubr.f32.mxu0 0.0
    %v681 = vand.u32 %v85, 4294901760
    %682 = vmatmul.mubr.f32.gmra.mxu0 %v681
    %v683 = vpop.f32.mrf.mxu0
    %v684 = vadd.f32 %v557, %v683
    %v685 = vpop.f32.mrf.mxu0
    %v686 = vadd.f32 %v559, %v685
    %687 = vdwg.mxu0
    %688 = vmatprep.subr.mxu0 0.0
    %689 = vmatpush1.msra.mxu0 0.0
    %690 = vmatprep.subr.mxu0 0.0
    %691 = vmatpush1.msra.mxu0 0.0
    %692 = vmatprep.subr.mxu0 0.0
    %693 = vmatpush1.msra.mxu0 0.0
    %694 = vmatprep.subr.mxu0 0.0
    %695 = vmatpush1.msra.mxu0 0.0
    %696 = vmatprep.subr.mxu0 0.0
    %697 = vmatpush1.msra.mxu0 0.0
    %698 = vmatprep.subr.mxu0 0.0
    %699 = vmatpush1.msra.mxu0 0.0
    %700 = vmatprep.subr.mxu0 0.0
    %701 = vmatpush1.msra.mxu0 0.0
    %702 = vmatprep.subr.mxu0 0.0
    %703 = vmatpush1.msra.mxu0 0.0
    %v704 = vand.u32 %v65, 4294901760
    %705 = vmatprep.subr.mxu0 %v704
    %v706 = vand.u32 %v64, 4294901760
    %707 = vmatpush1.msra.mxu0 %v706
    %v708 = vand.u32 %v63, 4294901760
    %709 = vmatprep.subr.mxu0 %v708
    %v710 = vand.u32 %v62, 4294901760
    %711 = vmatpush1.msra.mxu0 %v710
    %v712 = vand.u32 %v61, 4294901760
    %713 = vmatprep.subr.mxu0 %v712
    %v714 = vand.u32 %v60, 4294901760
    %715 = vmatpush1.msra.mxu0 %v714
    %v716 = vand.u32 %v59, 4294901760
    %717 = vmatprep.subr.mxu0 %v716
    %v718 = vand.u32 %v58, 4294901760
    %719 = vmatpush1.msra.mxu0 %v718
    %v720 = vand.u32 %v57, 4294901760
    %721 = vmatprep.subr.mxu0 %v720
    %v722 = vand.u32 %v56, 4294901760
    %723 = vmatpush1.msra.mxu0 %v722
    %v724 = vand.u32 %v55, 4294901760
    %725 = vmatprep.subr.mxu0 %v724
    %v726 = vand.u32 %v54, 4294901760
    %727 = vmatpush1.msra.mxu0 %v726
    %v728 = vand.u32 %v53, 4294901760
    %729 = vmatprep.subr.mxu0 %v728
    %v730 = vand.u32 %v52, 4294901760
    %731 = vmatpush1.msra.mxu0 %v730
    %v732 = vand.u32 %v51, 4294901760
    %733 = vmatprep.subr.mxu0 %v732
    %v734 = vand.u32 %v50, 4294901760
    %735 = vmatpush1.msra.mxu0 %v734
    %736 = vmatprep.subr.mxu0 0.0
    %737 = vmatpush2.msra.mxu0 0.0
    %738 = vmatprep.subr.mxu0 0.0
    %739 = vmatpush2.msra.mxu0 0.0
    %740 = vmatprep.subr.mxu0 0.0
    %741 = vmatpush2.msra.mxu0 0.0
    %742 = vmatprep.subr.mxu0 0.0
    %743 = vmatpush2.msra.mxu0 0.0
    %744 = vmatprep.subr.mxu0 0.0
    %745 = vmatpush2.msra.mxu0 0.0
    %746 = vmatprep.subr.mxu0 0.0
    %747 = vmatpush2.msra.mxu0 0.0
    %748 = vmatprep.subr.mxu0 0.0
    %749 = vmatpush2.msra.mxu0 0.0
    %750 = vmatprep.subr.mxu0 0.0
    %751 = vmatpush2.msra.mxu0 0.0
    %752 = vmatprep.subr.mxu0 0.0
    %753 = vmatpush2.msra.mxu0 0.0
    %754 = vmatprep.subr.mxu0 0.0
    %755 = vmatpush2.msra.mxu0 0.0
    %756 = vmatprep.subr.mxu0 0.0
    %757 = vmatpush2.msra.mxu0 0.0
    %758 = vmatprep.subr.mxu0 0.0
    %759 = vmatpush2.msra.mxu0 0.0
    %760 = vmatprep.subr.mxu0 0.0
    %761 = vmatpush2.msra.mxu0 0.0
    %762 = vmatprep.subr.mxu0 0.0
    %763 = vmatpush2.msra.mxu0 0.0
    %764 = vmatprep.subr.mxu0 0.0
    %765 = vmatpush2.msra.mxu0 0.0
    %766 = vmatprep.subr.mxu0 0.0
    %767 = vmatpush2.msra.mxu0 0.0
    %768 = vmatprep.mubr.f32.mxu0 0.0
    %v769 = vand.u32 %v82, 4294901760
    %770 = vmatmul.mubr.f32.gmra.mxu0 %v769
    %v771 = vpop.f32.mrf.mxu0
    %v772 = vadd.f32 %v677, %v771
    %v773 = vpop.f32.mrf.mxu0
    %v774 = vadd.f32 %v679, %v773
    %775 = vmatprep.mubr.f32.mxu0 0.0
    %v776 = vand.u32 %v85, 4294901760
    %777 = vmatmul.mubr.f32.gmra.mxu0 %v776
    %v778 = vpop.f32.mrf.mxu0
    %v779 = vadd.f32 %v684, %v778
    %v780 = vpop.f32.mrf.mxu0
    %v781 = vadd.f32 %v686, %v780
    %782 = vdwg.mxu0
    %v783 = vld [vmem:[%s2] sm:$0xff]
    %v784 = vld [vmem:[%s2 + $0x8] sm:$0xff]
    %785 = vset.pattern.permute.xlu0 0
    %786 = vperm.xlu0 %785, %v783
    %v787 = vpop.permute.xlu0 %786
    %788 = vset.pattern.permute.xlu0 0
    %789 = vperm.xlu0 %788, %v784
    %v790 = vpop.permute.xlu0 %789
    %vm791 = vcmp.eq.s32.totalorder %v787, %v37
    %vm792 = vcmp.eq.s32.totalorder %v790, %v37
    %v793 = vsel %vm791, 1, 0
    %v794 = vsel %vm792, 1, 0
    %v795 = vcvt.s32.f32 %v793
    %v796 = vcvt.s32.f32 %v794
    %v797 = vld [vmem:[%s4] sm:$0xff]
    %v798 = vld [vmem:[%s4 + $0x8] sm:$0xff]
    %v799 = vld [vmem:[%s4 + $0x10] sm:$0xff]
    %v800 = vld [vmem:[%s4 + $0x18] sm:$0xff]
    %vm801 = vcmask 130048
    %v803 = vsel %vm801, %v795, 0
    %v806 = vsel %vm801, %v796, 0
    %808 = vmatprep.subr.mxu0 0.0
    %809 = vmatpush1.msra.mxu0 0.0
    %810 = vmatprep.subr.mxu0 0.0
    %811 = vmatpush1.msra.mxu0 0.0
    %812 = vmatprep.subr.mxu0 0.0
    %813 = vmatpush1.msra.mxu0 0.0
    %814 = vmatprep.subr.mxu0 0.0
    %815 = vmatpush1.msra.mxu0 0.0
    %816 = vmatprep.subr.mxu0 0.0
    %817 = vmatpush1.msra.mxu0 0.0
    %818 = vmatprep.subr.mxu0 0.0
    %819 = vmatpush1.msra.mxu0 0.0
    %820 = vmatprep.subr.mxu0 0.0
    %821 = vmatpush1.msra.mxu0 0.0
    %822 = vmatprep.subr.mxu0 0.0
    %823 = vmatpush1.msra.mxu0 0.0
    %824 = vmatprep.subr.mxu0 0.0
    %825 = vmatpush1.msra.mxu0 0.0
    %826 = vmatprep.subr.mxu0 0.0
    %827 = vmatpush1.msra.mxu0 0.0
    %828 = vmatprep.subr.mxu0 0.0
    %829 = vmatpush1.msra.mxu0 0.0
    %830 = vmatprep.subr.mxu0 0.0
    %831 = vmatpush1.msra.mxu0 0.0
    %832 = vmatprep.subr.mxu0 0.0
    %833 = vmatpush1.msra.mxu0 0.0
    %834 = vmatprep.subr.mxu0 0.0
    %835 = vmatpush1.msra.mxu0 0.0
    %v836 = vand.u32 %v800, 4294901760
    %837 = vmatprep.subr.mxu0 %v836
    %v838 = vand.u32 %v799, 4294901760
    %839 = vmatpush1.msra.mxu0 %v838
    %v840 = vand.u32 %v798, 4294901760
    %841 = vmatprep.subr.mxu0 %v840
    %v842 = vand.u32 %v797, 4294901760
    %843 = vmatpush1.msra.mxu0 %v842
    %844 = vmatprep.subr.mxu0 0.0
    %845 = vmatpush2.msra.mxu0 0.0
    %846 = vmatprep.subr.mxu0 0.0
    %847 = vmatpush2.msra.mxu0 0.0
    %848 = vmatprep.subr.mxu0 0.0
    %849 = vmatpush2.msra.mxu0 0.0
    %850 = vmatprep.subr.mxu0 0.0
    %851 = vmatpush2.msra.mxu0 0.0
    %852 = vmatprep.subr.mxu0 0.0
    %853 = vmatpush2.msra.mxu0 0.0
    %854 = vmatprep.subr.mxu0 0.0
    %855 = vmatpush2.msra.mxu0 0.0
    %856 = vmatprep.subr.mxu0 0.0
    %857 = vmatpush2.msra.mxu0 0.0
    %858 = vmatprep.subr.mxu0 0.0
    %859 = vmatpush2.msra.mxu0 0.0
    %860 = vmatprep.subr.mxu0 0.0
    %861 = vmatpush2.msra.mxu0 0.0
    %862 = vmatprep.subr.mxu0 0.0
    %863 = vmatpush2.msra.mxu0 0.0
    %864 = vmatprep.subr.mxu0 0.0
    %865 = vmatpush2.msra.mxu0 0.0
    %866 = vmatprep.subr.mxu0 0.0
    %867 = vmatpush2.msra.mxu0 0.0
    %868 = vmatprep.subr.mxu0 0.0
    %869 = vmatpush2.msra.mxu0 0.0
    %870 = vmatprep.subr.mxu0 0.0
    %871 = vmatpush2.msra.mxu0 0.0
    %872 = vmatprep.subr.mxu0 0.0
    %873 = vmatpush2.msra.mxu0 0.0
    %874 = vmatprep.subr.mxu0 0.0
    %875 = vmatpush2.msra.mxu0 0.0
    %876 = vmatprep.mubr.f32.mxu0 0.0
    %v877 = vand.u32 %v803, 4294901760
    %v878 = vsub.f32 %v803, %v877
    %v879 = vand.u32 %v878, 4294901760
    %v880 = vsub.f32 %v878, %v879
    %v881 = vand.u32 %v880, 4294901760
    %882 = vmatmul.mubr.f32.gmra.mxu0 %v881
    %v883 = vpop.f32.mrf.mxu0
    %v884 = vadd.f32 0.0, %v883
    %v885 = vpop.f32.mrf.mxu0
    %v886 = vadd.f32 0.0, %v885
    %887 = vmatprep.mubr.f32.mxu0 0.0
    %v888 = vand.u32 %v806, 4294901760
    %v889 = vsub.f32 %v806, %v888
    %v890 = vand.u32 %v889, 4294901760
    %v891 = vsub.f32 %v889, %v890
    %v892 = vand.u32 %v891, 4294901760
    %893 = vmatmul.mubr.f32.gmra.mxu0 %v892
    %v894 = vpop.f32.mrf.mxu0
    %v895 = vadd.f32 0.0, %v894
    %v896 = vpop.f32.mrf.mxu0
    %v897 = vadd.f32 0.0, %v896
    %898 = vdwg.mxu0
    %899 = vmatprep.subr.mxu0 0.0
    %900 = vmatpush1.msra.mxu0 0.0
    %901 = vmatprep.subr.mxu0 0.0
    %902 = vmatpush1.msra.mxu0 0.0
    %903 = vmatprep.subr.mxu0 0.0
    %904 = vmatpush1.msra.mxu0 0.0
    %905 = vmatprep.subr.mxu0 0.0
    %906 = vmatpush1.msra.mxu0 0.0
    %907 = vmatprep.subr.mxu0 0.0
    %908 = vmatpush1.msra.mxu0 0.0
    %909 = vmatprep.subr.mxu0 0.0
    %910 = vmatpush1.msra.mxu0 0.0
    %911 = vmatprep.subr.mxu0 0.0
    %912 = vmatpush1.msra.mxu0 0.0
    %913 = vmatprep.subr.mxu0 0.0
    %914 = vmatpush1.msra.mxu0 0.0
    %915 = vmatprep.subr.mxu0 0.0
    %916 = vmatpush1.msra.mxu0 0.0
    %917 = vmatprep.subr.mxu0 0.0
    %918 = vmatpush1.msra.mxu0 0.0
    %919 = vmatprep.subr.mxu0 0.0
    %920 = vmatpush1.msra.mxu0 0.0
    %921 = vmatprep.subr.mxu0 0.0
    %922 = vmatpush1.msra.mxu0 0.0
    %923 = vmatprep.subr.mxu0 0.0
    %924 = vmatpush1.msra.mxu0 0.0
    %925 = vmatprep.subr.mxu0 0.0
    %926 = vmatpush1.msra.mxu0 0.0
    %v927 = vand.u32 %v800, 4294901760
    %v928 = vsub.f32 %v800, %v927
    %v929 = vand.u32 %v928, 4294901760
    %v930 = vsub.f32 %v928, %v929
    %v931 = vand.u32 %v930, 4294901760
    %932 = vmatprep.subr.mxu0 %v931
    %v933 = vand.u32 %v799, 4294901760
    %v934 = vsub.f32 %v799, %v933
    %v935 = vand.u32 %v934, 4294901760
    %v936 = vsub.f32 %v934, %v935
    %v937 = vand.u32 %v936, 4294901760
    %938 = vmatpush1.msra.mxu0 %v937
    %v939 = vand.u32 %v798, 4294901760
    %v940 = vsub.f32 %v798, %v939
    %v941 = vand.u32 %v940, 4294901760
    %v942 = vsub.f32 %v940, %v941
    %v943 = vand.u32 %v942, 4294901760
    %944 = vmatprep.subr.mxu0 %v943
    %v945 = vand.u32 %v797, 4294901760
    %v946 = vsub.f32 %v797, %v945
    %v947 = vand.u32 %v946, 4294901760
    %v948 = vsub.f32 %v946, %v947
    %v949 = vand.u32 %v948, 4294901760
    %950 = vmatpush1.msra.mxu0 %v949
    %951 = vmatprep.subr.mxu0 0.0
    %952 = vmatpush2.msra.mxu0 0.0
    %953 = vmatprep.subr.mxu0 0.0
    %954 = vmatpush2.msra.mxu0 0.0
    %955 = vmatprep.subr.mxu0 0.0
    %956 = vmatpush2.msra.mxu0 0.0
    %957 = vmatprep.subr.mxu0 0.0
    %958 = vmatpush2.msra.mxu0 0.0
    %959 = vmatprep.subr.mxu0 0.0
    %960 = vmatpush2.msra.mxu0 0.0
    %961 = vmatprep.subr.mxu0 0.0
    %962 = vmatpush2.msra.mxu0 0.0
    %963 = vmatprep.subr.mxu0 0.0
    %964 = vmatpush2.msra.mxu0 0.0
    %965 = vmatprep.subr.mxu0 0.0
    %966 = vmatpush2.msra.mxu0 0.0
    %967 = vmatprep.subr.mxu0 0.0
    %968 = vmatpush2.msra.mxu0 0.0
    %969 = vmatprep.subr.mxu0 0.0
    %970 = vmatpush2.msra.mxu0 0.0
    %971 = vmatprep.subr.mxu0 0.0
    %972 = vmatpush2.msra.mxu0 0.0
    %973 = vmatprep.subr.mxu0 0.0
    %974 = vmatpush2.msra.mxu0 0.0
    %975 = vmatprep.subr.mxu0 0.0
    %976 = vmatpush2.msra.mxu0 0.0
    %977 = vmatprep.subr.mxu0 0.0
    %978 = vmatpush2.msra.mxu0 0.0
    %979 = vmatprep.subr.mxu0 0.0
    %980 = vmatpush2.msra.mxu0 0.0
    %981 = vmatprep.subr.mxu0 0.0
    %982 = vmatpush2.msra.mxu0 0.0
    %983 = vmatprep.mubr.f32.mxu0 0.0
    %v984 = vand.u32 %v803, 4294901760
    %985 = vmatmul.mubr.f32.gmra.mxu0 %v984
    %v986 = vpop.f32.mrf.mxu0
    %v987 = vadd.f32 %v884, %v986
    %v988 = vpop.f32.mrf.mxu0
    %v989 = vadd.f32 %v886, %v988
    %990 = vmatprep.mubr.f32.mxu0 0.0
    %v991 = vand.u32 %v806, 4294901760
    %992 = vmatmul.mubr.f32.gmra.mxu0 %v991
    %v993 = vpop.f32.mrf.mxu0
    %v994 = vadd.f32 %v895, %v993
    %v995 = vpop.f32.mrf.mxu0
    %v996 = vadd.f32 %v897, %v995
    %997 = vdwg.mxu0
    %998 = vmatprep.subr.mxu0 0.0
    %999 = vmatpush1.msra.mxu0 0.0
    %1000 = vmatprep.subr.mxu0 0.0
    %1001 = vmatpush1.msra.mxu0 0.0
    %1002 = vmatprep.subr.mxu0 0.0
    %1003 = vmatpush1.msra.mxu0 0.0
    %1004 = vmatprep.subr.mxu0 0.0
    %1005 = vmatpush1.msra.mxu0 0.0
    %1006 = vmatprep.subr.mxu0 0.0
    %1007 = vmatpush1.msra.mxu0 0.0
    %1008 = vmatprep.subr.mxu0 0.0
    %1009 = vmatpush1.msra.mxu0 0.0
    %1010 = vmatprep.subr.mxu0 0.0
    %1011 = vmatpush1.msra.mxu0 0.0
    %1012 = vmatprep.subr.mxu0 0.0
    %1013 = vmatpush1.msra.mxu0 0.0
    %1014 = vmatprep.subr.mxu0 0.0
    %1015 = vmatpush1.msra.mxu0 0.0
    %1016 = vmatprep.subr.mxu0 0.0
    %1017 = vmatpush1.msra.mxu0 0.0
    %1018 = vmatprep.subr.mxu0 0.0
    %1019 = vmatpush1.msra.mxu0 0.0
    %1020 = vmatprep.subr.mxu0 0.0
    %1021 = vmatpush1.msra.mxu0 0.0
    %1022 = vmatprep.subr.mxu0 0.0
    %1023 = vmatpush1.msra.mxu0 0.0
    %1024 = vmatprep.subr.mxu0 0.0
    %1025 = vmatpush1.msra.mxu0 0.0
    %v1026 = vand.u32 %v800, 4294901760
    %v1027 = vsub.f32 %v800, %v1026
    %1028 = vmatprep.subr.mxu0 %v1027
    %v1029 = vand.u32 %v799, 4294901760
    %v1030 = vsub.f32 %v799, %v1029
    %1031 = vmatpush1.msra.mxu0 %v1030
    %v1032 = vand.u32 %v798, 4294901760
    %v1033 = vsub.f32 %v798, %v1032
    %1034 = vmatprep.subr.mxu0 %v1033
    %v1035 = vand.u32 %v797, 4294901760
    %v1036 = vsub.f32 %v797, %v1035
    %1037 = vmatpush1.msra.mxu0 %v1036
    %1038 = vmatprep.subr.mxu0 0.0
    %1039 = vmatpush2.msra.mxu0 0.0
    %1040 = vmatprep.subr.mxu0 0.0
    %1041 = vmatpush2.msra.mxu0 0.0
    %1042 = vmatprep.subr.mxu0 0.0
    %1043 = vmatpush2.msra.mxu0 0.0
    %1044 = vmatprep.subr.mxu0 0.0
    %1045 = vmatpush2.msra.mxu0 0.0
    %1046 = vmatprep.subr.mxu0 0.0
    %1047 = vmatpush2.msra.mxu0 0.0
    %1048 = vmatprep.subr.mxu0 0.0
    %1049 = vmatpush2.msra.mxu0 0.0
    %1050 = vmatprep.subr.mxu0 0.0
    %1051 = vmatpush2.msra.mxu0 0.0
    %1052 = vmatprep.subr.mxu0 0.0
    %1053 = vmatpush2.msra.mxu0 0.0
    %1054 = vmatprep.subr.mxu0 0.0
    %1055 = vmatpush2.msra.mxu0 0.0
    %1056 = vmatprep.subr.mxu0 0.0
    %1057 = vmatpush2.msra.mxu0 0.0
    %1058 = vmatprep.subr.mxu0 0.0
    %1059 = vmatpush2.msra.mxu0 0.0
    %1060 = vmatprep.subr.mxu0 0.0
    %1061 = vmatpush2.msra.mxu0 0.0
    %1062 = vmatprep.subr.mxu0 0.0
    %1063 = vmatpush2.msra.mxu0 0.0
    %1064 = vmatprep.subr.mxu0 0.0
    %1065 = vmatpush2.msra.mxu0 0.0
    %1066 = vmatprep.subr.mxu0 0.0
    %1067 = vmatpush2.msra.mxu0 0.0
    %1068 = vmatprep.subr.mxu0 0.0
    %1069 = vmatpush2.msra.mxu0 0.0
    %1070 = vmatprep.mubr.f32.mxu0 0.0
    %v1071 = vand.u32 %v803, 4294901760
    %v1072 = vsub.f32 %v803, %v1071
    %1073 = vmatmul.mubr.f32.gmra.mxu0 %v1072
    %v1074 = vpop.f32.mrf.mxu0
    %v1075 = vadd.f32 %v987, %v1074
    %v1076 = vpop.f32.mrf.mxu0
    %v1077 = vadd.f32 %v989, %v1076
    %1078 = vmatprep.mubr.f32.mxu0 0.0
    %v1079 = vand.u32 %v806, 4294901760
    %v1080 = vsub.f32 %v806, %v1079
    %1081 = vmatmul.mubr.f32.gmra.mxu0 %v1080
    %v1082 = vpop.f32.mrf.mxu0
    %v1083 = vadd.f32 %v994, %v1082
    %v1084 = vpop.f32.mrf.mxu0
    %v1085 = vadd.f32 %v996, %v1084
    %1086 = vdwg.mxu0
    %1087 = vmatprep.subr.mxu0 0.0
    %1088 = vmatpush1.msra.mxu0 0.0
    %1089 = vmatprep.subr.mxu0 0.0
    %1090 = vmatpush1.msra.mxu0 0.0
    %1091 = vmatprep.subr.mxu0 0.0
    %1092 = vmatpush1.msra.mxu0 0.0
    %1093 = vmatprep.subr.mxu0 0.0
    %1094 = vmatpush1.msra.mxu0 0.0
    %1095 = vmatprep.subr.mxu0 0.0
    %1096 = vmatpush1.msra.mxu0 0.0
    %1097 = vmatprep.subr.mxu0 0.0
    %1098 = vmatpush1.msra.mxu0 0.0
    %1099 = vmatprep.subr.mxu0 0.0
    %1100 = vmatpush1.msra.mxu0 0.0
    %1101 = vmatprep.subr.mxu0 0.0
    %1102 = vmatpush1.msra.mxu0 0.0
    %1103 = vmatprep.subr.mxu0 0.0
    %1104 = vmatpush1.msra.mxu0 0.0
    %1105 = vmatprep.subr.mxu0 0.0
    %1106 = vmatpush1.msra.mxu0 0.0
    %1107 = vmatprep.subr.mxu0 0.0
    %1108 = vmatpush1.msra.mxu0 0.0
    %1109 = vmatprep.subr.mxu0 0.0
    %1110 = vmatpush1.msra.mxu0 0.0
    %1111 = vmatprep.subr.mxu0 0.0
    %1112 = vmatpush1.msra.mxu0 0.0
    %1113 = vmatprep.subr.mxu0 0.0
    %1114 = vmatpush1.msra.mxu0 0.0
    %v1115 = vand.u32 %v800, 4294901760
    %1116 = vmatprep.subr.mxu0 %v1115
    %v1117 = vand.u32 %v799, 4294901760
    %1118 = vmatpush1.msra.mxu0 %v1117
    %v1119 = vand.u32 %v798, 4294901760
    %1120 = vmatprep.subr.mxu0 %v1119
    %v1121 = vand.u32 %v797, 4294901760
    %1122 = vmatpush1.msra.mxu0 %v1121
    %1123 = vmatprep.subr.mxu0 0.0
    %1124 = vmatpush2.msra.mxu0 0.0
    %1125 = vmatprep.subr.mxu0 0.0
    %1126 = vmatpush2.msra.mxu0 0.0
    %1127 = vmatprep.subr.mxu0 0.0
    %1128 = vmatpush2.msra.mxu0 0.0
    %1129 = vmatprep.subr.mxu0 0.0
    %1130 = vmatpush2.msra.mxu0 0.0
    %1131 = vmatprep.subr.mxu0 0.0
    %1132 = vmatpush2.msra.mxu0 0.0
    %1133 = vmatprep.subr.mxu0 0.0
    %1134 = vmatpush2.msra.mxu0 0.0
    %1135 = vmatprep.subr.mxu0 0.0
    %1136 = vmatpush2.msra.mxu0 0.0
    %1137 = vmatprep.subr.mxu0 0.0
    %1138 = vmatpush2.msra.mxu0 0.0
    %1139 = vmatprep.subr.mxu0 0.0
    %1140 = vmatpush2.msra.mxu0 0.0
    %1141 = vmatprep.subr.mxu0 0.0
    %1142 = vmatpush2.msra.mxu0 0.0
    %1143 = vmatprep.subr.mxu0 0.0
    %1144 = vmatpush2.msra.mxu0 0.0
    %1145 = vmatprep.subr.mxu0 0.0
    %1146 = vmatpush2.msra.mxu0 0.0
    %1147 = vmatprep.subr.mxu0 0.0
    %1148 = vmatpush2.msra.mxu0 0.0
    %1149 = vmatprep.subr.mxu0 0.0
    %1150 = vmatpush2.msra.mxu0 0.0
    %1151 = vmatprep.subr.mxu0 0.0
    %1152 = vmatpush2.msra.mxu0 0.0
    %1153 = vmatprep.subr.mxu0 0.0
    %1154 = vmatpush2.msra.mxu0 0.0
    %1155 = vmatprep.mubr.f32.mxu0 0.0
    %v1156 = vand.u32 %v803, 4294901760
    %v1157 = vsub.f32 %v803, %v1156
    %v1158 = vand.u32 %v1157, 4294901760
    %1159 = vmatmul.mubr.f32.gmra.mxu0 %v1158
    %v1160 = vpop.f32.mrf.mxu0
    %v1161 = vadd.f32 %v1075, %v1160
    %v1162 = vpop.f32.mrf.mxu0
    %v1163 = vadd.f32 %v1077, %v1162
    %1164 = vmatprep.mubr.f32.mxu0 0.0
    %v1165 = vand.u32 %v806, 4294901760
    %v1166 = vsub.f32 %v806, %v1165
    %v1167 = vand.u32 %v1166, 4294901760
    %1168 = vmatmul.mubr.f32.gmra.mxu0 %v1167
    %v1169 = vpop.f32.mrf.mxu0
    %v1170 = vadd.f32 %v1083, %v1169
    %v1171 = vpop.f32.mrf.mxu0
    %v1172 = vadd.f32 %v1085, %v1171
    %1173 = vdwg.mxu0
    %1174 = vmatprep.subr.mxu0 0.0
    %1175 = vmatpush1.msra.mxu0 0.0
    %1176 = vmatprep.subr.mxu0 0.0
    %1177 = vmatpush1.msra.mxu0 0.0
    %1178 = vmatprep.subr.mxu0 0.0
    %1179 = vmatpush1.msra.mxu0 0.0
    %1180 = vmatprep.subr.mxu0 0.0
    %1181 = vmatpush1.msra.mxu0 0.0
    %1182 = vmatprep.subr.mxu0 0.0
    %1183 = vmatpush1.msra.mxu0 0.0
    %1184 = vmatprep.subr.mxu0 0.0
    %1185 = vmatpush1.msra.mxu0 0.0
    %1186 = vmatprep.subr.mxu0 0.0
    %1187 = vmatpush1.msra.mxu0 0.0
    %1188 = vmatprep.subr.mxu0 0.0
    %1189 = vmatpush1.msra.mxu0 0.0
    %1190 = vmatprep.subr.mxu0 0.0
    %1191 = vmatpush1.msra.mxu0 0.0
    %1192 = vmatprep.subr.mxu0 0.0
    %1193 = vmatpush1.msra.mxu0 0.0
    %1194 = vmatprep.subr.mxu0 0.0
    %1195 = vmatpush1.msra.mxu0 0.0
    %1196 = vmatprep.subr.mxu0 0.0
    %1197 = vmatpush1.msra.mxu0 0.0
    %1198 = vmatprep.subr.mxu0 0.0
    %1199 = vmatpush1.msra.mxu0 0.0
    %1200 = vmatprep.subr.mxu0 0.0
    %1201 = vmatpush1.msra.mxu0 0.0
    %v1202 = vand.u32 %v800, 4294901760
    %v1203 = vsub.f32 %v800, %v1202
    %v1204 = vand.u32 %v1203, 4294901760
    %1205 = vmatprep.subr.mxu0 %v1204
    %v1206 = vand.u32 %v799, 4294901760
    %v1207 = vsub.f32 %v799, %v1206
    %v1208 = vand.u32 %v1207, 4294901760
    %1209 = vmatpush1.msra.mxu0 %v1208
    %v1210 = vand.u32 %v798, 4294901760
    %v1211 = vsub.f32 %v798, %v1210
    %v1212 = vand.u32 %v1211, 4294901760
    %1213 = vmatprep.subr.mxu0 %v1212
    %v1214 = vand.u32 %v797, 4294901760
    %v1215 = vsub.f32 %v797, %v1214
    %v1216 = vand.u32 %v1215, 4294901760
    %1217 = vmatpush1.msra.mxu0 %v1216
    %1218 = vmatprep.subr.mxu0 0.0
    %1219 = vmatpush2.msra.mxu0 0.0
    %1220 = vmatprep.subr.mxu0 0.0
    %1221 = vmatpush2.msra.mxu0 0.0
    %1222 = vmatprep.subr.mxu0 0.0
    %1223 = vmatpush2.msra.mxu0 0.0
    %1224 = vmatprep.subr.mxu0 0.0
    %1225 = vmatpush2.msra.mxu0 0.0
    %1226 = vmatprep.subr.mxu0 0.0
    %1227 = vmatpush2.msra.mxu0 0.0
    %1228 = vmatprep.subr.mxu0 0.0
    %1229 = vmatpush2.msra.mxu0 0.0
    %1230 = vmatprep.subr.mxu0 0.0
    %1231 = vmatpush2.msra.mxu0 0.0
    %1232 = vmatprep.subr.mxu0 0.0
    %1233 = vmatpush2.msra.mxu0 0.0
    %1234 = vmatprep.subr.mxu0 0.0
    %1235 = vmatpush2.msra.mxu0 0.0
    %1236 = vmatprep.subr.mxu0 0.0
    %1237 = vmatpush2.msra.mxu0 0.0
    %1238 = vmatprep.subr.mxu0 0.0
    %1239 = vmatpush2.msra.mxu0 0.0
    %1240 = vmatprep.subr.mxu0 0.0
    %1241 = vmatpush2.msra.mxu0 0.0
    %1242 = vmatprep.subr.mxu0 0.0
    %1243 = vmatpush2.msra.mxu0 0.0
    %1244 = vmatprep.subr.mxu0 0.0
    %1245 = vmatpush2.msra.mxu0 0.0
    %1246 = vmatprep.subr.mxu0 0.0
    %1247 = vmatpush2.msra.mxu0 0.0
    %1248 = vmatprep.subr.mxu0 0.0
    %1249 = vmatpush2.msra.mxu0 0.0
    %1250 = vmatprep.mubr.f32.mxu0 0.0
    %v1251 = vand.u32 %v803, 4294901760
    %1252 = vmatmul.mubr.f32.gmra.mxu0 %v1251
    %v1253 = vpop.f32.mrf.mxu0
    %v1254 = vadd.f32 %v1161, %v1253
    %v1255 = vpop.f32.mrf.mxu0
    %v1256 = vadd.f32 %v1163, %v1255
    %1257 = vmatprep.mubr.f32.mxu0 0.0
    %v1258 = vand.u32 %v806, 4294901760
    %1259 = vmatmul.mubr.f32.gmra.mxu0 %v1258
    %v1260 = vpop.f32.mrf.mxu0
    %v1261 = vadd.f32 %v1170, %v1260
    %v1262 = vpop.f32.mrf.mxu0
    %v1263 = vadd.f32 %v1172, %v1262
    %1264 = vdwg.mxu0
    %1265 = vmatprep.subr.mxu0 0.0
    %1266 = vmatpush1.msra.mxu0 0.0
    %1267 = vmatprep.subr.mxu0 0.0
    %1268 = vmatpush1.msra.mxu0 0.0
    %1269 = vmatprep.subr.mxu0 0.0
    %1270 = vmatpush1.msra.mxu0 0.0
    %1271 = vmatprep.subr.mxu0 0.0
    %1272 = vmatpush1.msra.mxu0 0.0
    %1273 = vmatprep.subr.mxu0 0.0
    %1274 = vmatpush1.msra.mxu0 0.0
    %1275 = vmatprep.subr.mxu0 0.0
    %1276 = vmatpush1.msra.mxu0 0.0
    %1277 = vmatprep.subr.mxu0 0.0
    %1278 = vmatpush1.msra.mxu0 0.0
    %1279 = vmatprep.subr.mxu0 0.0
    %1280 = vmatpush1.msra.mxu0 0.0
    %1281 = vmatprep.subr.mxu0 0.0
    %1282 = vmatpush1.msra.mxu0 0.0
    %1283 = vmatprep.subr.mxu0 0.0
    %1284 = vmatpush1.msra.mxu0 0.0
    %1285 = vmatprep.subr.mxu0 0.0
    %1286 = vmatpush1.msra.mxu0 0.0
    %1287 = vmatprep.subr.mxu0 0.0
    %1288 = vmatpush1.msra.mxu0 0.0
    %1289 = vmatprep.subr.mxu0 0.0
    %1290 = vmatpush1.msra.mxu0 0.0
    %1291 = vmatprep.subr.mxu0 0.0
    %1292 = vmatpush1.msra.mxu0 0.0
    %v1293 = vand.u32 %v800, 4294901760
    %1294 = vmatprep.subr.mxu0 %v1293
    %v1295 = vand.u32 %v799, 4294901760
    %1296 = vmatpush1.msra.mxu0 %v1295
    %v1297 = vand.u32 %v798, 4294901760
    %1298 = vmatprep.subr.mxu0 %v1297
    %v1299 = vand.u32 %v797, 4294901760
    %1300 = vmatpush1.msra.mxu0 %v1299
    %1301 = vmatprep.subr.mxu0 0.0
    %1302 = vmatpush2.msra.mxu0 0.0
    %1303 = vmatprep.subr.mxu0 0.0
    %1304 = vmatpush2.msra.mxu0 0.0
    %1305 = vmatprep.subr.mxu0 0.0
    %1306 = vmatpush2.msra.mxu0 0.0
    %1307 = vmatprep.subr.mxu0 0.0
    %1308 = vmatpush2.msra.mxu0 0.0
    %1309 = vmatprep.subr.mxu0 0.0
    %1310 = vmatpush2.msra.mxu0 0.0
    %1311 = vmatprep.subr.mxu0 0.0
    %1312 = vmatpush2.msra.mxu0 0.0
    %1313 = vmatprep.subr.mxu0 0.0
    %1314 = vmatpush2.msra.mxu0 0.0
    %1315 = vmatprep.subr.mxu0 0.0
    %1316 = vmatpush2.msra.mxu0 0.0
    %1317 = vmatprep.subr.mxu0 0.0
    %1318 = vmatpush2.msra.mxu0 0.0
    %1319 = vmatprep.subr.mxu0 0.0
    %1320 = vmatpush2.msra.mxu0 0.0
    %1321 = vmatprep.subr.mxu0 0.0
    %1322 = vmatpush2.msra.mxu0 0.0
    %1323 = vmatprep.subr.mxu0 0.0
    %1324 = vmatpush2.msra.mxu0 0.0
    %1325 = vmatprep.subr.mxu0 0.0
    %1326 = vmatpush2.msra.mxu0 0.0
    %1327 = vmatprep.subr.mxu0 0.0
    %1328 = vmatpush2.msra.mxu0 0.0
    %1329 = vmatprep.subr.mxu0 0.0
    %1330 = vmatpush2.msra.mxu0 0.0
    %1331 = vmatprep.subr.mxu0 0.0
    %1332 = vmatpush2.msra.mxu0 0.0
    %1333 = vmatprep.mubr.f32.mxu0 0.0
    %v1334 = vand.u32 %v803, 4294901760
    %1335 = vmatmul.mubr.f32.gmra.mxu0 %v1334
    %v1336 = vpop.f32.mrf.mxu0
    %v1337 = vadd.f32 %v1254, %v1336
    %v1338 = vpop.f32.mrf.mxu0
    %v1339 = vadd.f32 %v1256, %v1338
    %1340 = vmatprep.mubr.f32.mxu0 0.0
    %v1341 = vand.u32 %v806, 4294901760
    %1342 = vmatmul.mubr.f32.gmra.mxu0 %v1341
    %v1343 = vpop.f32.mrf.mxu0
    %v1344 = vadd.f32 %v1261, %v1343
    %v1345 = vpop.f32.mrf.mxu0
    %v1346 = vadd.f32 %v1263, %v1345
    %1347 = vdwg.mxu0
    %v1349 = vsel %vm80, %v48, 0
    %v1352 = vsel %vm80, %v49, 0
    %1354 = vmatprep.subr.mxu0 0.0
    %1355 = vmatpush1.msra.mxu0 0.0
    %1356 = vmatprep.subr.mxu0 0.0
    %1357 = vmatpush1.msra.mxu0 0.0
    %1358 = vmatprep.subr.mxu0 0.0
    %1359 = vmatpush1.msra.mxu0 0.0
    %1360 = vmatprep.subr.mxu0 0.0
    %1361 = vmatpush1.msra.mxu0 0.0
    %1362 = vmatprep.subr.mxu0 0.0
    %1363 = vmatpush1.msra.mxu0 0.0
    %1364 = vmatprep.subr.mxu0 0.0
    %1365 = vmatpush1.msra.mxu0 0.0
    %1366 = vmatprep.subr.mxu0 0.0
    %1367 = vmatpush1.msra.mxu0 0.0
    %1368 = vmatprep.subr.mxu0 0.0
    %1369 = vmatpush1.msra.mxu0 0.0
    %v1370 = vand.u32 %v65, 4294901760
    %1371 = vmatprep.subr.mxu0 %v1370
    %v1372 = vand.u32 %v64, 4294901760
    %1373 = vmatpush1.msra.mxu0 %v1372
    %v1374 = vand.u32 %v63, 4294901760
    %1375 = vmatprep.subr.mxu0 %v1374
    %v1376 = vand.u32 %v62, 4294901760
    %1377 = vmatpush1.msra.mxu0 %v1376
    %v1378 = vand.u32 %v61, 4294901760
    %1379 = vmatprep.subr.mxu0 %v1378
    %v1380 = vand.u32 %v60, 4294901760
    %1381 = vmatpush1.msra.mxu0 %v1380
    %v1382 = vand.u32 %v59, 4294901760
    %1383 = vmatprep.subr.mxu0 %v1382
    %v1384 = vand.u32 %v58, 4294901760
    %1385 = vmatpush1.msra.mxu0 %v1384
    %v1386 = vand.u32 %v57, 4294901760
    %1387 = vmatprep.subr.mxu0 %v1386
    %v1388 = vand.u32 %v56, 4294901760
    %1389 = vmatpush1.msra.mxu0 %v1388
    %v1390 = vand.u32 %v55, 4294901760
    %1391 = vmatprep.subr.mxu0 %v1390
    %v1392 = vand.u32 %v54, 4294901760
    %1393 = vmatpush1.msra.mxu0 %v1392
    %v1394 = vand.u32 %v53, 4294901760
    %1395 = vmatprep.subr.mxu0 %v1394
    %v1396 = vand.u32 %v52, 4294901760
    %1397 = vmatpush1.msra.mxu0 %v1396
    %v1398 = vand.u32 %v51, 4294901760
    %1399 = vmatprep.subr.mxu0 %v1398
    %v1400 = vand.u32 %v50, 4294901760
    %1401 = vmatpush1.msra.mxu0 %v1400
    %1402 = vmatprep.subr.mxu0 0.0
    %1403 = vmatpush2.msra.mxu0 0.0
    %1404 = vmatprep.subr.mxu0 0.0
    %1405 = vmatpush2.msra.mxu0 0.0
    %1406 = vmatprep.subr.mxu0 0.0
    %1407 = vmatpush2.msra.mxu0 0.0
    %1408 = vmatprep.subr.mxu0 0.0
    %1409 = vmatpush2.msra.mxu0 0.0
    %1410 = vmatprep.subr.mxu0 0.0
    %1411 = vmatpush2.msra.mxu0 0.0
    %1412 = vmatprep.subr.mxu0 0.0
    %1413 = vmatpush2.msra.mxu0 0.0
    %1414 = vmatprep.subr.mxu0 0.0
    %1415 = vmatpush2.msra.mxu0 0.0
    %1416 = vmatprep.subr.mxu0 0.0
    %1417 = vmatpush2.msra.mxu0 0.0
    %1418 = vmatprep.subr.mxu0 0.0
    %1419 = vmatpush2.msra.mxu0 0.0
    %1420 = vmatprep.subr.mxu0 0.0
    %1421 = vmatpush2.msra.mxu0 0.0
    %1422 = vmatprep.subr.mxu0 0.0
    %1423 = vmatpush2.msra.mxu0 0.0
    %1424 = vmatprep.subr.mxu0 0.0
    %1425 = vmatpush2.msra.mxu0 0.0
    %1426 = vmatprep.subr.mxu0 0.0
    %1427 = vmatpush2.msra.mxu0 0.0
    %1428 = vmatprep.subr.mxu0 0.0
    %1429 = vmatpush2.msra.mxu0 0.0
    %1430 = vmatprep.subr.mxu0 0.0
    %1431 = vmatpush2.msra.mxu0 0.0
    %1432 = vmatprep.subr.mxu0 0.0
    %1433 = vmatpush2.msra.mxu0 0.0
    %1434 = vmatprep.mubr.f32.mxu0 0.0
    %v1435 = vand.u32 %v1349, 4294901760
    %v1436 = vsub.f32 %v1349, %v1435
    %v1437 = vand.u32 %v1436, 4294901760
    %v1438 = vsub.f32 %v1436, %v1437
    %v1439 = vand.u32 %v1438, 4294901760
    %1440 = vmatmul.mubr.f32.gmra.mxu0 %v1439
    %v1441 = vpop.f32.mrf.mxu0
    %v1442 = vadd.f32 %v1337, %v1441
    %v1443 = vpop.f32.mrf.mxu0
    %v1444 = vadd.f32 %v1339, %v1443
    %1445 = vmatprep.mubr.f32.mxu0 0.0
    %v1446 = vand.u32 %v1352, 4294901760
    %v1447 = vsub.f32 %v1352, %v1446
    %v1448 = vand.u32 %v1447, 4294901760
    %v1449 = vsub.f32 %v1447, %v1448
    %v1450 = vand.u32 %v1449, 4294901760
    %1451 = vmatmul.mubr.f32.gmra.mxu0 %v1450
    %v1452 = vpop.f32.mrf.mxu0
    %v1453 = vadd.f32 %v1344, %v1452
    %v1454 = vpop.f32.mrf.mxu0
    %v1455 = vadd.f32 %v1346, %v1454
    %1456 = vdwg.mxu0
    %1457 = vmatprep.subr.mxu0 0.0
    %1458 = vmatpush1.msra.mxu0 0.0
    %1459 = vmatprep.subr.mxu0 0.0
    %1460 = vmatpush1.msra.mxu0 0.0
    %1461 = vmatprep.subr.mxu0 0.0
    %1462 = vmatpush1.msra.mxu0 0.0
    %1463 = vmatprep.subr.mxu0 0.0
    %1464 = vmatpush1.msra.mxu0 0.0
    %1465 = vmatprep.subr.mxu0 0.0
    %1466 = vmatpush1.msra.mxu0 0.0
    %1467 = vmatprep.subr.mxu0 0.0
    %1468 = vmatpush1.msra.mxu0 0.0
    %1469 = vmatprep.subr.mxu0 0.0
    %1470 = vmatpush1.msra.mxu0 0.0
    %1471 = vmatprep.subr.mxu0 0.0
    %1472 = vmatpush1.msra.mxu0 0.0
    %v1473 = vand.u32 %v65, 4294901760
    %v1474 = vsub.f32 %v65, %v1473
    %v1475 = vand.u32 %v1474, 4294901760
    %v1476 = vsub.f32 %v1474, %v1475
    %v1477 = vand.u32 %v1476, 4294901760
    %1478 = vmatprep.subr.mxu0 %v1477
    %v1479 = vand.u32 %v64, 4294901760
    %v1480 = vsub.f32 %v64, %v1479
    %v1481 = vand.u32 %v1480, 4294901760
    %v1482 = vsub.f32 %v1480, %v1481
    %v1483 = vand.u32 %v1482, 4294901760
    %1484 = vmatpush1.msra.mxu0 %v1483
    %v1485 = vand.u32 %v63, 4294901760
    %v1486 = vsub.f32 %v63, %v1485
    %v1487 = vand.u32 %v1486, 4294901760
    %v1488 = vsub.f32 %v1486, %v1487
    %v1489 = vand.u32 %v1488, 4294901760
    %1490 = vmatprep.subr.mxu0 %v1489
    %v1491 = vand.u32 %v62, 4294901760
    %v1492 = vsub.f32 %v62, %v1491
    %v1493 = vand.u32 %v1492, 4294901760
    %v1494 = vsub.f32 %v1492, %v1493
    %v1495 = vand.u32 %v1494, 4294901760
    %1496 = vmatpush1.msra.mxu0 %v1495
    %v1497 = vand.u32 %v61, 4294901760
    %v1498 = vsub.f32 %v61, %v1497
    %v1499 = vand.u32 %v1498, 4294901760
    %v1500 = vsub.f32 %v1498, %v1499
    %v1501 = vand.u32 %v1500, 4294901760
    %1502 = vmatprep.subr.mxu0 %v1501
    %v1503 = vand.u32 %v60, 4294901760
    %v1504 = vsub.f32 %v60, %v1503
    %v1505 = vand.u32 %v1504, 4294901760
    %v1506 = vsub.f32 %v1504, %v1505
    %v1507 = vand.u32 %v1506, 4294901760
    %1508 = vmatpush1.msra.mxu0 %v1507
    %v1509 = vand.u32 %v59, 4294901760
    %v1510 = vsub.f32 %v59, %v1509
    %v1511 = vand.u32 %v1510, 4294901760
    %v1512 = vsub.f32 %v1510, %v1511
    %v1513 = vand.u32 %v1512, 4294901760
    %1514 = vmatprep.subr.mxu0 %v1513
    %v1515 = vand.u32 %v58, 4294901760
    %v1516 = vsub.f32 %v58, %v1515
    %v1517 = vand.u32 %v1516, 4294901760
    %v1518 = vsub.f32 %v1516, %v1517
    %v1519 = vand.u32 %v1518, 4294901760
    %1520 = vmatpush1.msra.mxu0 %v1519
    %v1521 = vand.u32 %v57, 4294901760
    %v1522 = vsub.f32 %v57, %v1521
    %v1523 = vand.u32 %v1522, 4294901760
    %v1524 = vsub.f32 %v1522, %v1523
    %v1525 = vand.u32 %v1524, 4294901760
    %1526 = vmatprep.subr.mxu0 %v1525
    %v1527 = vand.u32 %v56, 4294901760
    %v1528 = vsub.f32 %v56, %v1527
    %v1529 = vand.u32 %v1528, 4294901760
    %v1530 = vsub.f32 %v1528, %v1529
    %v1531 = vand.u32 %v1530, 4294901760
    %1532 = vmatpush1.msra.mxu0 %v1531
    %v1533 = vand.u32 %v55, 4294901760
    %v1534 = vsub.f32 %v55, %v1533
    %v1535 = vand.u32 %v1534, 4294901760
    %v1536 = vsub.f32 %v1534, %v1535
    %v1537 = vand.u32 %v1536, 4294901760
    %1538 = vmatprep.subr.mxu0 %v1537
    %v1539 = vand.u32 %v54, 4294901760
    %v1540 = vsub.f32 %v54, %v1539
    %v1541 = vand.u32 %v1540, 4294901760
    %v1542 = vsub.f32 %v1540, %v1541
    %v1543 = vand.u32 %v1542, 4294901760
    %1544 = vmatpush1.msra.mxu0 %v1543
    %v1545 = vand.u32 %v53, 4294901760
    %v1546 = vsub.f32 %v53, %v1545
    %v1547 = vand.u32 %v1546, 4294901760
    %v1548 = vsub.f32 %v1546, %v1547
    %v1549 = vand.u32 %v1548, 4294901760
    %1550 = vmatprep.subr.mxu0 %v1549
    %v1551 = vand.u32 %v52, 4294901760
    %v1552 = vsub.f32 %v52, %v1551
    %v1553 = vand.u32 %v1552, 4294901760
    %v1554 = vsub.f32 %v1552, %v1553
    %v1555 = vand.u32 %v1554, 4294901760
    %1556 = vmatpush1.msra.mxu0 %v1555
    %v1557 = vand.u32 %v51, 4294901760
    %v1558 = vsub.f32 %v51, %v1557
    %v1559 = vand.u32 %v1558, 4294901760
    %v1560 = vsub.f32 %v1558, %v1559
    %v1561 = vand.u32 %v1560, 4294901760
    %1562 = vmatprep.subr.mxu0 %v1561
    %v1563 = vand.u32 %v50, 4294901760
    %v1564 = vsub.f32 %v50, %v1563
    %v1565 = vand.u32 %v1564, 4294901760
    %v1566 = vsub.f32 %v1564, %v1565
    %v1567 = vand.u32 %v1566, 4294901760
    %1568 = vmatpush1.msra.mxu0 %v1567
    %1569 = vmatprep.subr.mxu0 0.0
    %1570 = vmatpush2.msra.mxu0 0.0
    %1571 = vmatprep.subr.mxu0 0.0
    %1572 = vmatpush2.msra.mxu0 0.0
    %1573 = vmatprep.subr.mxu0 0.0
    %1574 = vmatpush2.msra.mxu0 0.0
    %1575 = vmatprep.subr.mxu0 0.0
    %1576 = vmatpush2.msra.mxu0 0.0
    %1577 = vmatprep.subr.mxu0 0.0
    %1578 = vmatpush2.msra.mxu0 0.0
    %1579 = vmatprep.subr.mxu0 0.0
    %1580 = vmatpush2.msra.mxu0 0.0
    %1581 = vmatprep.subr.mxu0 0.0
    %1582 = vmatpush2.msra.mxu0 0.0
    %1583 = vmatprep.subr.mxu0 0.0
    %1584 = vmatpush2.msra.mxu0 0.0
    %1585 = vmatprep.subr.mxu0 0.0
    %1586 = vmatpush2.msra.mxu0 0.0
    %1587 = vmatprep.subr.mxu0 0.0
    %1588 = vmatpush2.msra.mxu0 0.0
    %1589 = vmatprep.subr.mxu0 0.0
    %1590 = vmatpush2.msra.mxu0 0.0
    %1591 = vmatprep.subr.mxu0 0.0
    %1592 = vmatpush2.msra.mxu0 0.0
    %1593 = vmatprep.subr.mxu0 0.0
    %1594 = vmatpush2.msra.mxu0 0.0
    %1595 = vmatprep.subr.mxu0 0.0
    %1596 = vmatpush2.msra.mxu0 0.0
    %1597 = vmatprep.subr.mxu0 0.0
    %1598 = vmatpush2.msra.mxu0 0.0
    %1599 = vmatprep.subr.mxu0 0.0
    %1600 = vmatpush2.msra.mxu0 0.0
    %1601 = vmatprep.mubr.f32.mxu0 0.0
    %v1602 = vand.u32 %v1349, 4294901760
    %1603 = vmatmul.mubr.f32.gmra.mxu0 %v1602
    %v1604 = vpop.f32.mrf.mxu0
    %v1605 = vadd.f32 %v1442, %v1604
    %v1606 = vpop.f32.mrf.mxu0
    %v1607 = vadd.f32 %v1444, %v1606
    %1608 = vmatprep.mubr.f32.mxu0 0.0
    %v1609 = vand.u32 %v1352, 4294901760
    %1610 = vmatmul.mubr.f32.gmra.mxu0 %v1609
    %v1611 = vpop.f32.mrf.mxu0
    %v1612 = vadd.f32 %v1453, %v1611
    %v1613 = vpop.f32.mrf.mxu0
    %v1614 = vadd.f32 %v1455, %v1613
    %1615 = vdwg.mxu0
    %1616 = vmatprep.subr.mxu0 0.0
    %1617 = vmatpush1.msra.mxu0 0.0
    %1618 = vmatprep.subr.mxu0 0.0
    %1619 = vmatpush1.msra.mxu0 0.0
    %1620 = vmatprep.subr.mxu0 0.0
    %1621 = vmatpush1.msra.mxu0 0.0
    %1622 = vmatprep.subr.mxu0 0.0
    %1623 = vmatpush1.msra.mxu0 0.0
    %1624 = vmatprep.subr.mxu0 0.0
    %1625 = vmatpush1.msra.mxu0 0.0
    %1626 = vmatprep.subr.mxu0 0.0
    %1627 = vmatpush1.msra.mxu0 0.0
    %1628 = vmatprep.subr.mxu0 0.0
    %1629 = vmatpush1.msra.mxu0 0.0
    %1630 = vmatprep.subr.mxu0 0.0
    %1631 = vmatpush1.msra.mxu0 0.0
    %v1632 = vand.u32 %v65, 4294901760
    %v1633 = vsub.f32 %v65, %v1632
    %1634 = vmatprep.subr.mxu0 %v1633
    %v1635 = vand.u32 %v64, 4294901760
    %v1636 = vsub.f32 %v64, %v1635
    %1637 = vmatpush1.msra.mxu0 %v1636
    %v1638 = vand.u32 %v63, 4294901760
    %v1639 = vsub.f32 %v63, %v1638
    %1640 = vmatprep.subr.mxu0 %v1639
    %v1641 = vand.u32 %v62, 4294901760
    %v1642 = vsub.f32 %v62, %v1641
    %1643 = vmatpush1.msra.mxu0 %v1642
    %v1644 = vand.u32 %v61, 4294901760
    %v1645 = vsub.f32 %v61, %v1644
    %1646 = vmatprep.subr.mxu0 %v1645
    %v1647 = vand.u32 %v60, 4294901760
    %v1648 = vsub.f32 %v60, %v1647
    %1649 = vmatpush1.msra.mxu0 %v1648
    %v1650 = vand.u32 %v59, 4294901760
    %v1651 = vsub.f32 %v59, %v1650
    %1652 = vmatprep.subr.mxu0 %v1651
    %v1653 = vand.u32 %v58, 4294901760
    %v1654 = vsub.f32 %v58, %v1653
    %1655 = vmatpush1.msra.mxu0 %v1654
    %v1656 = vand.u32 %v57, 4294901760
    %v1657 = vsub.f32 %v57, %v1656
    %1658 = vmatprep.subr.mxu0 %v1657
    %v1659 = vand.u32 %v56, 4294901760
    %v1660 = vsub.f32 %v56, %v1659
    %1661 = vmatpush1.msra.mxu0 %v1660
    %v1662 = vand.u32 %v55, 4294901760
    %v1663 = vsub.f32 %v55, %v1662
    %1664 = vmatprep.subr.mxu0 %v1663
    %v1665 = vand.u32 %v54, 4294901760
    %v1666 = vsub.f32 %v54, %v1665
    %1667 = vmatpush1.msra.mxu0 %v1666
    %v1668 = vand.u32 %v53, 4294901760
    %v1669 = vsub.f32 %v53, %v1668
    %1670 = vmatprep.subr.mxu0 %v1669
    %v1671 = vand.u32 %v52, 4294901760
    %v1672 = vsub.f32 %v52, %v1671
    %1673 = vmatpush1.msra.mxu0 %v1672
    %v1674 = vand.u32 %v51, 4294901760
    %v1675 = vsub.f32 %v51, %v1674
    %1676 = vmatprep.subr.mxu0 %v1675
    %v1677 = vand.u32 %v50, 4294901760
    %v1678 = vsub.f32 %v50, %v1677
    %1679 = vmatpush1.msra.mxu0 %v1678
    %1680 = vmatprep.subr.mxu0 0.0
    %1681 = vmatpush2.msra.mxu0 0.0
    %1682 = vmatprep.subr.mxu0 0.0
    %1683 = vmatpush2.msra.mxu0 0.0
    %1684 = vmatprep.subr.mxu0 0.0
    %1685 = vmatpush2.msra.mxu0 0.0
    %1686 = vmatprep.subr.mxu0 0.0
    %1687 = vmatpush2.msra.mxu0 0.0
    %1688 = vmatprep.subr.mxu0 0.0
    %1689 = vmatpush2.msra.mxu0 0.0
    %1690 = vmatprep.subr.mxu0 0.0
    %1691 = vmatpush2.msra.mxu0 0.0
    %1692 = vmatprep.subr.mxu0 0.0
    %1693 = vmatpush2.msra.mxu0 0.0
    %1694 = vmatprep.subr.mxu0 0.0
    %1695 = vmatpush2.msra.mxu0 0.0
    %1696 = vmatprep.subr.mxu0 0.0
    %1697 = vmatpush2.msra.mxu0 0.0
    %1698 = vmatprep.subr.mxu0 0.0
    %1699 = vmatpush2.msra.mxu0 0.0
    %1700 = vmatprep.subr.mxu0 0.0
    %1701 = vmatpush2.msra.mxu0 0.0
    %1702 = vmatprep.subr.mxu0 0.0
    %1703 = vmatpush2.msra.mxu0 0.0
    %1704 = vmatprep.subr.mxu0 0.0
    %1705 = vmatpush2.msra.mxu0 0.0
    %1706 = vmatprep.subr.mxu0 0.0
    %1707 = vmatpush2.msra.mxu0 0.0
    %1708 = vmatprep.subr.mxu0 0.0
    %1709 = vmatpush2.msra.mxu0 0.0
    %1710 = vmatprep.subr.mxu0 0.0
    %1711 = vmatpush2.msra.mxu0 0.0
    %1712 = vmatprep.mubr.f32.mxu0 0.0
    %v1713 = vand.u32 %v1349, 4294901760
    %v1714 = vsub.f32 %v1349, %v1713
    %1715 = vmatmul.mubr.f32.gmra.mxu0 %v1714
    %v1716 = vpop.f32.mrf.mxu0
    %v1717 = vadd.f32 %v1605, %v1716
    %v1718 = vpop.f32.mrf.mxu0
    %v1719 = vadd.f32 %v1607, %v1718
    %1720 = vmatprep.mubr.f32.mxu0 0.0
    %v1721 = vand.u32 %v1352, 4294901760
    %v1722 = vsub.f32 %v1352, %v1721
    %1723 = vmatmul.mubr.f32.gmra.mxu0 %v1722
    %v1724 = vpop.f32.mrf.mxu0
    %v1725 = vadd.f32 %v1612, %v1724
    %v1726 = vpop.f32.mrf.mxu0
    %v1727 = vadd.f32 %v1614, %v1726
    %1728 = vdwg.mxu0
    %1729 = vmatprep.subr.mxu0 0.0
    %1730 = vmatpush1.msra.mxu0 0.0
    %1731 = vmatprep.subr.mxu0 0.0
    %1732 = vmatpush1.msra.mxu0 0.0
    %1733 = vmatprep.subr.mxu0 0.0
    %1734 = vmatpush1.msra.mxu0 0.0
    %1735 = vmatprep.subr.mxu0 0.0
    %1736 = vmatpush1.msra.mxu0 0.0
    %1737 = vmatprep.subr.mxu0 0.0
    %1738 = vmatpush1.msra.mxu0 0.0
    %1739 = vmatprep.subr.mxu0 0.0
    %1740 = vmatpush1.msra.mxu0 0.0
    %1741 = vmatprep.subr.mxu0 0.0
    %1742 = vmatpush1.msra.mxu0 0.0
    %1743 = vmatprep.subr.mxu0 0.0
    %1744 = vmatpush1.msra.mxu0 0.0
    %v1745 = vand.u32 %v65, 4294901760
    %1746 = vmatprep.subr.mxu0 %v1745
    %v1747 = vand.u32 %v64, 4294901760
    %1748 = vmatpush1.msra.mxu0 %v1747
    %v1749 = vand.u32 %v63, 4294901760
    %1750 = vmatprep.subr.mxu0 %v1749
    %v1751 = vand.u32 %v62, 4294901760
    %1752 = vmatpush1.msra.mxu0 %v1751
    %v1753 = vand.u32 %v61, 4294901760
    %1754 = vmatprep.subr.mxu0 %v1753
    %v1755 = vand.u32 %v60, 4294901760
    %1756 = vmatpush1.msra.mxu0 %v1755
    %v1757 = vand.u32 %v59, 4294901760
    %1758 = vmatprep.subr.mxu0 %v1757
    %v1759 = vand.u32 %v58, 4294901760
    %1760 = vmatpush1.msra.mxu0 %v1759
    %v1761 = vand.u32 %v57, 4294901760
    %1762 = vmatprep.subr.mxu0 %v1761
    %v1763 = vand.u32 %v56, 4294901760
    %1764 = vmatpush1.msra.mxu0 %v1763
    %v1765 = vand.u32 %v55, 4294901760
    %1766 = vmatprep.subr.mxu0 %v1765
    %v1767 = vand.u32 %v54, 4294901760
    %1768 = vmatpush1.msra.mxu0 %v1767
    %v1769 = vand.u32 %v53, 4294901760
    %1770 = vmatprep.subr.mxu0 %v1769
    %v1771 = vand.u32 %v52, 4294901760
    %1772 = vmatpush1.msra.mxu0 %v1771
    %v1773 = vand.u32 %v51, 4294901760
    %1774 = vmatprep.subr.mxu0 %v1773
    %v1775 = vand.u32 %v50, 4294901760
    %1776 = vmatpush1.msra.mxu0 %v1775
    %1777 = vmatprep.subr.mxu0 0.0
    %1778 = vmatpush2.msra.mxu0 0.0
    %1779 = vmatprep.subr.mxu0 0.0
    %1780 = vmatpush2.msra.mxu0 0.0
    %1781 = vmatprep.subr.mxu0 0.0
    %1782 = vmatpush2.msra.mxu0 0.0
    %1783 = vmatprep.subr.mxu0 0.0
    %1784 = vmatpush2.msra.mxu0 0.0
    %1785 = vmatprep.subr.mxu0 0.0
    %1786 = vmatpush2.msra.mxu0 0.0
    %1787 = vmatprep.subr.mxu0 0.0
    %1788 = vmatpush2.msra.mxu0 0.0
    %1789 = vmatprep.subr.mxu0 0.0
    %1790 = vmatpush2.msra.mxu0 0.0
    %1791 = vmatprep.subr.mxu0 0.0
    %1792 = vmatpush2.msra.mxu0 0.0
    %1793 = vmatprep.subr.mxu0 0.0
    %1794 = vmatpush2.msra.mxu0 0.0
    %1795 = vmatprep.subr.mxu0 0.0
    %1796 = vmatpush2.msra.mxu0 0.0
    %1797 = vmatprep.subr.mxu0 0.0
    %1798 = vmatpush2.msra.mxu0 0.0
    %1799 = vmatprep.subr.mxu0 0.0
    %1800 = vmatpush2.msra.mxu0 0.0
    %1801 = vmatprep.subr.mxu0 0.0
    %1802 = vmatpush2.msra.mxu0 0.0
    %1803 = vmatprep.subr.mxu0 0.0
    %1804 = vmatpush2.msra.mxu0 0.0
    %1805 = vmatprep.subr.mxu0 0.0
    %1806 = vmatpush2.msra.mxu0 0.0
    %1807 = vmatprep.subr.mxu0 0.0
    %1808 = vmatpush2.msra.mxu0 0.0
    %1809 = vmatprep.mubr.f32.mxu0 0.0
    %v1810 = vand.u32 %v1349, 4294901760
    %v1811 = vsub.f32 %v1349, %v1810
    %v1812 = vand.u32 %v1811, 4294901760
    %1813 = vmatmul.mubr.f32.gmra.mxu0 %v1812
    %v1814 = vpop.f32.mrf.mxu0
    %v1815 = vadd.f32 %v1717, %v1814
    %v1816 = vpop.f32.mrf.mxu0
    %v1817 = vadd.f32 %v1719, %v1816
    %1818 = vmatprep.mubr.f32.mxu0 0.0
    %v1819 = vand.u32 %v1352, 4294901760
    %v1820 = vsub.f32 %v1352, %v1819
    %v1821 = vand.u32 %v1820, 4294901760
    %1822 = vmatmul.mubr.f32.gmra.mxu0 %v1821
    %v1823 = vpop.f32.mrf.mxu0
    %v1824 = vadd.f32 %v1725, %v1823
    %v1825 = vpop.f32.mrf.mxu0
    %v1826 = vadd.f32 %v1727, %v1825
    %1827 = vdwg.mxu0
    %1828 = vmatprep.subr.mxu0 0.0
    %1829 = vmatpush1.msra.mxu0 0.0
    %1830 = vmatprep.subr.mxu0 0.0
    %1831 = vmatpush1.msra.mxu0 0.0
    %1832 = vmatprep.subr.mxu0 0.0
    %1833 = vmatpush1.msra.mxu0 0.0
    %1834 = vmatprep.subr.mxu0 0.0
    %1835 = vmatpush1.msra.mxu0 0.0
    %1836 = vmatprep.subr.mxu0 0.0
    %1837 = vmatpush1.msra.mxu0 0.0
    %1838 = vmatprep.subr.mxu0 0.0
    %1839 = vmatpush1.msra.mxu0 0.0
    %1840 = vmatprep.subr.mxu0 0.0
    %1841 = vmatpush1.msra.mxu0 0.0
    %1842 = vmatprep.subr.mxu0 0.0
    %1843 = vmatpush1.msra.mxu0 0.0
    %v1844 = vand.u32 %v65, 4294901760
    %v1845 = vsub.f32 %v65, %v1844
    %v1846 = vand.u32 %v1845, 4294901760
    %1847 = vmatprep.subr.mxu0 %v1846
    %v1848 = vand.u32 %v64, 4294901760
    %v1849 = vsub.f32 %v64, %v1848
    %v1850 = vand.u32 %v1849, 4294901760
    %1851 = vmatpush1.msra.mxu0 %v1850
    %v1852 = vand.u32 %v63, 4294901760
    %v1853 = vsub.f32 %v63, %v1852
    %v1854 = vand.u32 %v1853, 4294901760
    %1855 = vmatprep.subr.mxu0 %v1854
    %v1856 = vand.u32 %v62, 4294901760
    %v1857 = vsub.f32 %v62, %v1856
    %v1858 = vand.u32 %v1857, 4294901760
    %1859 = vmatpush1.msra.mxu0 %v1858
    %v1860 = vand.u32 %v61, 4294901760
    %v1861 = vsub.f32 %v61, %v1860
    %v1862 = vand.u32 %v1861, 4294901760
    %1863 = vmatprep.subr.mxu0 %v1862
    %v1864 = vand.u32 %v60, 4294901760
    %v1865 = vsub.f32 %v60, %v1864
    %v1866 = vand.u32 %v1865, 4294901760
    %1867 = vmatpush1.msra.mxu0 %v1866
    %v1868 = vand.u32 %v59, 4294901760
    %v1869 = vsub.f32 %v59, %v1868
    %v1870 = vand.u32 %v1869, 4294901760
    %1871 = vmatprep.subr.mxu0 %v1870
    %v1872 = vand.u32 %v58, 4294901760
    %v1873 = vsub.f32 %v58, %v1872
    %v1874 = vand.u32 %v1873, 4294901760
    %1875 = vmatpush1.msra.mxu0 %v1874
    %v1876 = vand.u32 %v57, 4294901760
    %v1877 = vsub.f32 %v57, %v1876
    %v1878 = vand.u32 %v1877, 4294901760
    %1879 = vmatprep.subr.mxu0 %v1878
    %v1880 = vand.u32 %v56, 4294901760
    %v1881 = vsub.f32 %v56, %v1880
    %v1882 = vand.u32 %v1881, 4294901760
    %1883 = vmatpush1.msra.mxu0 %v1882
    %v1884 = vand.u32 %v55, 4294901760
    %v1885 = vsub.f32 %v55, %v1884
    %v1886 = vand.u32 %v1885, 4294901760
    %1887 = vmatprep.subr.mxu0 %v1886
    %v1888 = vand.u32 %v54, 4294901760
    %v1889 = vsub.f32 %v54, %v1888
    %v1890 = vand.u32 %v1889, 4294901760
    %1891 = vmatpush1.msra.mxu0 %v1890
    %v1892 = vand.u32 %v53, 4294901760
    %v1893 = vsub.f32 %v53, %v1892
    %v1894 = vand.u32 %v1893, 4294901760
    %1895 = vmatprep.subr.mxu0 %v1894
    %v1896 = vand.u32 %v52, 4294901760
    %v1897 = vsub.f32 %v52, %v1896
    %v1898 = vand.u32 %v1897, 4294901760
    %1899 = vmatpush1.msra.mxu0 %v1898
    %v1900 = vand.u32 %v51, 4294901760
    %v1901 = vsub.f32 %v51, %v1900
    %v1902 = vand.u32 %v1901, 4294901760
    %1903 = vmatprep.subr.mxu0 %v1902
    %v1904 = vand.u32 %v50, 4294901760
    %v1905 = vsub.f32 %v50, %v1904
    %v1906 = vand.u32 %v1905, 4294901760
    %1907 = vmatpush1.msra.mxu0 %v1906
    %1908 = vmatprep.subr.mxu0 0.0
    %1909 = vmatpush2.msra.mxu0 0.0
    %1910 = vmatprep.subr.mxu0 0.0
    %1911 = vmatpush2.msra.mxu0 0.0
    %1912 = vmatprep.subr.mxu0 0.0
    %1913 = vmatpush2.msra.mxu0 0.0
    %1914 = vmatprep.subr.mxu0 0.0
    %1915 = vmatpush2.msra.mxu0 0.0
    %1916 = vmatprep.subr.mxu0 0.0
    %1917 = vmatpush2.msra.mxu0 0.0
    %1918 = vmatprep.subr.mxu0 0.0
    %1919 = vmatpush2.msra.mxu0 0.0
    %1920 = vmatprep.subr.mxu0 0.0
    %1921 = vmatpush2.msra.mxu0 0.0
    %1922 = vmatprep.subr.mxu0 0.0
    %1923 = vmatpush2.msra.mxu0 0.0
    %1924 = vmatprep.subr.mxu0 0.0
    %1925 = vmatpush2.msra.mxu0 0.0
    %1926 = vmatprep.subr.mxu0 0.0
    %1927 = vmatpush2.msra.mxu0 0.0
    %1928 = vmatprep.subr.mxu0 0.0
    %1929 = vmatpush2.msra.mxu0 0.0
    %1930 = vmatprep.subr.mxu0 0.0
    %1931 = vmatpush2.msra.mxu0 0.0
    %1932 = vmatprep.subr.mxu0 0.0
    %1933 = vmatpush2.msra.mxu0 0.0
    %1934 = vmatprep.subr.mxu0 0.0
    %1935 = vmatpush2.msra.mxu0 0.0
    %1936 = vmatprep.subr.mxu0 0.0
    %1937 = vmatpush2.msra.mxu0 0.0
    %1938 = vmatprep.subr.mxu0 0.0
    %1939 = vmatpush2.msra.mxu0 0.0
    %1940 = vmatprep.mubr.f32.mxu0 0.0
    %v1941 = vand.u32 %v1349, 4294901760
    %1942 = vmatmul.mubr.f32.gmra.mxu0 %v1941
    %v1943 = vpop.f32.mrf.mxu0
    %v1944 = vadd.f32 %v1815, %v1943
    %v1945 = vpop.f32.mrf.mxu0
    %v1946 = vadd.f32 %v1817, %v1945
    %1947 = vmatprep.mubr.f32.mxu0 0.0
    %v1948 = vand.u32 %v1352, 4294901760
    %1949 = vmatmul.mubr.f32.gmra.mxu0 %v1948
    %v1950 = vpop.f32.mrf.mxu0
    %v1951 = vadd.f32 %v1824, %v1950
    %v1952 = vpop.f32.mrf.mxu0
    %v1953 = vadd.f32 %v1826, %v1952
    %1954 = vdwg.mxu0
    %1955 = vmatprep.subr.mxu0 0.0
    %1956 = vmatpush1.msra.mxu0 0.0
    %1957 = vmatprep.subr.mxu0 0.0
    %1958 = vmatpush1.msra.mxu0 0.0
    %1959 = vmatprep.subr.mxu0 0.0
    %1960 = vmatpush1.msra.mxu0 0.0
    %1961 = vmatprep.subr.mxu0 0.0
    %1962 = vmatpush1.msra.mxu0 0.0
    %1963 = vmatprep.subr.mxu0 0.0
    %1964 = vmatpush1.msra.mxu0 0.0
    %1965 = vmatprep.subr.mxu0 0.0
    %1966 = vmatpush1.msra.mxu0 0.0
    %1967 = vmatprep.subr.mxu0 0.0
    %1968 = vmatpush1.msra.mxu0 0.0
    %1969 = vmatprep.subr.mxu0 0.0
    %1970 = vmatpush1.msra.mxu0 0.0
    %v1971 = vand.u32 %v65, 4294901760
    %1972 = vmatprep.subr.mxu0 %v1971
    %v1973 = vand.u32 %v64, 4294901760
    %1974 = vmatpush1.msra.mxu0 %v1973
    %v1975 = vand.u32 %v63, 4294901760
    %1976 = vmatprep.subr.mxu0 %v1975
    %v1977 = vand.u32 %v62, 4294901760
    %1978 = vmatpush1.msra.mxu0 %v1977
    %v1979 = vand.u32 %v61, 4294901760
    %1980 = vmatprep.subr.mxu0 %v1979
    %v1981 = vand.u32 %v60, 4294901760
    %1982 = vmatpush1.msra.mxu0 %v1981
    %v1983 = vand.u32 %v59, 4294901760
    %1984 = vmatprep.subr.mxu0 %v1983
    %v1985 = vand.u32 %v58, 4294901760
    %1986 = vmatpush1.msra.mxu0 %v1985
    %v1987 = vand.u32 %v57, 4294901760
    %1988 = vmatprep.subr.mxu0 %v1987
    %v1989 = vand.u32 %v56, 4294901760
    %1990 = vmatpush1.msra.mxu0 %v1989
    %v1991 = vand.u32 %v55, 4294901760
    %1992 = vmatprep.subr.mxu0 %v1991
    %v1993 = vand.u32 %v54, 4294901760
    %1994 = vmatpush1.msra.mxu0 %v1993
    %v1995 = vand.u32 %v53, 4294901760
    %1996 = vmatprep.subr.mxu0 %v1995
    %v1997 = vand.u32 %v52, 4294901760
    %1998 = vmatpush1.msra.mxu0 %v1997
    %v1999 = vand.u32 %v51, 4294901760
    %2000 = vmatprep.subr.mxu0 %v1999
    %v2001 = vand.u32 %v50, 4294901760
    %2002 = vmatpush1.msra.mxu0 %v2001
    %2003 = vmatprep.subr.mxu0 0.0
    %2004 = vmatpush2.msra.mxu0 0.0
    %2005 = vmatprep.subr.mxu0 0.0
    %2006 = vmatpush2.msra.mxu0 0.0
    %2007 = vmatprep.subr.mxu0 0.0
    %2008 = vmatpush2.msra.mxu0 0.0
    %2009 = vmatprep.subr.mxu0 0.0
    %2010 = vmatpush2.msra.mxu0 0.0
    %2011 = vmatprep.subr.mxu0 0.0
    %2012 = vmatpush2.msra.mxu0 0.0
    %2013 = vmatprep.subr.mxu0 0.0
    %2014 = vmatpush2.msra.mxu0 0.0
    %2015 = vmatprep.subr.mxu0 0.0
    %2016 = vmatpush2.msra.mxu0 0.0
    %2017 = vmatprep.subr.mxu0 0.0
    %2018 = vmatpush2.msra.mxu0 0.0
    %2019 = vmatprep.subr.mxu0 0.0
    %2020 = vmatpush2.msra.mxu0 0.0
    %2021 = vmatprep.subr.mxu0 0.0
    %2022 = vmatpush2.msra.mxu0 0.0
    %2023 = vmatprep.subr.mxu0 0.0
    %2024 = vmatpush2.msra.mxu0 0.0
    %2025 = vmatprep.subr.mxu0 0.0
    %2026 = vmatpush2.msra.mxu0 0.0
    %2027 = vmatprep.subr.mxu0 0.0
    %2028 = vmatpush2.msra.mxu0 0.0
    %2029 = vmatprep.subr.mxu0 0.0
    %2030 = vmatpush2.msra.mxu0 0.0
    %2031 = vmatprep.subr.mxu0 0.0
    %2032 = vmatpush2.msra.mxu0 0.0
    %2033 = vmatprep.subr.mxu0 0.0
    %2034 = vmatpush2.msra.mxu0 0.0
    %2035 = vmatprep.mubr.f32.mxu0 0.0
    %v2036 = vand.u32 %v1349, 4294901760
    %2037 = vmatmul.mubr.f32.gmra.mxu0 %v2036
    %v2038 = vpop.f32.mrf.mxu0
    %v2039 = vadd.f32 %v1944, %v2038
    %v2040 = vpop.f32.mrf.mxu0
    %v2041 = vadd.f32 %v1946, %v2040
    %2042 = vmatprep.mubr.f32.mxu0 0.0
    %v2043 = vand.u32 %v1352, 4294901760
    %2044 = vmatmul.mubr.f32.gmra.mxu0 %v2043
    %v2045 = vpop.f32.mrf.mxu0
    %v2046 = vadd.f32 %v1951, %v2045
    %v2047 = vpop.f32.mrf.mxu0
    %v2048 = vadd.f32 %v1953, %v2047
    %2049 = vdwg.mxu0
    %v2050 = vsub.f32 %v2039, %v772
    %v2051 = vsub.f32 %v2041, %v774
    %v2052 = vsub.f32 %v2046, %v779
    %v2053 = vsub.f32 %v2048, %v781
    %v2054 = vand.u32 2147483647, %v2050
    %v2055 = vand.u32 2147483647, %v2051
    %v2056 = vand.u32 2147483647, %v2052
    %v2057 = vand.u32 2147483647, %v2053
    %vm2058 = vcmask 588800
    %v2059 = vsel %vm2058, %v2055, 0.0
    %v2060 = vadd.f32 %v2054, %v2059
    %2061 = vadd.xlane.f32.xlu0 %v2060
    %v2062 = vpop.xlane.xlu0 %2061
    %v2063 = vsel %vm2058, %v2057, 0.0
    %v2064 = vadd.f32 %v2056, %v2063
    %2065 = vadd.xlane.f32.xlu0 %v2064
    %v2066 = vpop.xlane.xlu0 %2065
    %vm2067 = vcmask 7168
    %2068 = vst.msk [vmem:[%s5] sm:$0xff] %vm2067, %v2062
    %2069 = vst.msk [vmem:[%s5 + $0x8] sm:$0xff] %vm2067, %v2066
    // Predicated region
    $region26: #{tpu_custom_call.1} parent=1 // pred_check
      _
    $region27: #{tpu_custom_call.1} parent=1 // pred_check_branch
      %2071 = sbr.rel (0) target = $region29
    $region28: #{tpu_custom_call.1} parent=1 // pred_region
      _
    $region29: #{tpu_custom_call.1} parent=1 // pred_fallthru
      _
    // Predicated region
    $region30: #{tpu_custom_call.1} parent=1 // pred_check
      _
    $region31: #{tpu_custom_call.1} parent=1 // pred_check_branch
      %2073 = sbr.rel (0) target = $region33
    $region32: #{tpu_custom_call.1} parent=1 // pred_region
      _
    $region33: #{tpu_custom_call.1} parent=1 // pred_fallthru
      _
    %2074 = vsyncpa [#allocation3], 1

</llo_original>
